<compile_context>
chip_gen: v7x
topology: tpu7x:2x2x1
jax: 0.10.0
libtpu: 0.0.40
codegen_flags: <defaults>
</compile_context>

<pallas_src>
import functools

import jax
import jax.numpy as jnp
from jax.experimental import pallas as pl
from jax.experimental.pallas import tpu as pltpu

_LANE = 128                      # lane width: feature dims padded to multiples of this
_SUBLANE = 8                     # sublane granule for the batch tile
_MAX_B_TILE = 512                # ~85% of HBM roofline at 512-row tiles (v6e measured)
_W0_RESIDENT_BYTES = 16 << 20    # above this, stream layer-0 weight in K chunks (v7x 64 MiB/TC)
_VMEM_SOFT_CAP = 48 << 20        # v7x-friendly request when it suffices
_VMEM_HARD_CAP = 100 << 20       # v5e/v6e physical VMEM is 128 MiB


def _round_up(x, m):
    return ((x + m - 1) // m) * m


def _cdiv(a, b):
    return -(-a // b)


def _mlp_kernel(num_layer, *refs):
    """Fused MLP forward on one (batch-tile, layer-0 K-tile) grid cell.

    refs = (x_ref, w0, b0, ..., w_{L-1}, b_{L-1}, out_ref, acc_ref)
    Layer 0 is K-tiled along grid axis 1 ('arbitrary'): bf16 partial products
    accumulate into the f32 VMEM scratch; the bias/ReLU epilogue and all remaining
    (VMEM-resident) layers run on the last K step only, then the lane-dense output
    tile is stored once.
    """
    x_ref = refs[0]
    params = refs[1:1 + 2 * num_layer]
    out_ref = refs[1 + 2 * num_layer]
    acc_ref = refs[2 + 2 * num_layer]

    k = pl.program_id(1)

    @pl.when(k == 0)
    def _init():
        acc_ref[...] = jnp.zeros_like(acc_ref)

    # Layer-0 partial matmul: bf16 operands on the MXU, f32 accumulation.
    acc_ref[...] += jnp.dot(x_ref[...], params[0][...],
                            preferred_element_type=jnp.float32)

    @pl.when(k == pl.num_programs(1) - 1)
    def _finalize():
        h = acc_ref[...] + params[1][...].astype(jnp.float32)     # f32 bias epilogue
        if num_layer > 1:
            h = jnp.maximum(h, 0.0)                               # ReLU
        for i in range(1, num_layer):
            w = params[2 * i][...]
            b = params[2 * i + 1][...]
            h = jnp.dot(h.astype(w.dtype), w,                     # bf16 MXU, f32 acc
                        preferred_element_type=jnp.float32)
            h = h + b.astype(jnp.float32)
            if i < num_layer - 1:
                h = jnp.maximum(h, 0.0)
        out_ref[...] = h.astype(out_ref.dtype)


def mlp_forward(x, weights, biases, adv=False, adv_lambda=1.0):
    """JAX/Pallas equivalent of MLP.forward.

    x       : array of shape (B, ...) — flattened along dim 1 like torch.flatten(x, 1)
    weights : list of (in_dim, out_dim) arrays   (transposed vs. torch Linear.weight)
    biases  : list of (out_dim,) arrays
    """
    B = x.shape[0]
    xf = x.reshape(B, -1)
    F_in = xf.shape[1]
    num_layer = len(weights)
    num_class = weights[-1].shape[1]
    out_dtype = x.dtype
    compute_dtype = jnp.bfloat16

    if adv:
        # ReverseLayerF: identity in forward (adv_lambda only affects backward).
        # TODO(synk): custom_vjp needed for the gradient reversal in training.
        xf = xf

    # --- layer-0 K-tiling geometry (lane-aligned; exact thanks to zero padding) ------
    F_in_128 = _round_up(F_in, _LANE)
    out0_pad = _round_up(weights[0].shape[1], _LANE)
    w0_bytes = F_in_128 * out0_pad * jnp.dtype(compute_dtype).itemsize
    n_k = max(1, _cdiv(w0_bytes, _W0_RESIDENT_BYTES))
    K_tile = _round_up(_cdiv(F_in_128, n_k), _LANE)
    n_k = _cdiv(F_in_128, K_tile)
    F_in_pad = n_k * K_tile

    # --- pad params: output dims up to multiples of 128, matching zero rows on the
    # next layer's input so the math is exact; weights bf16, biases f32 (epilogue).
    padded_w, padded_b = [], []
    prev_out_pad = F_in_pad
    for i, (w, b) in enumerate(zip(weights, biases)):
        din, dout = w.shape
        din_pad = prev_out_pad
        dout_pad = _round_up(dout, _LANE)
        wp = jnp.zeros((din_pad, dout_pad), compute_dtype).at[:din, :dout].set(
            w.astype(compute_dtype))
        bp = jnp.zeros((1, dout_pad), jnp.float32).at[0, :dout].set(b.astype(jnp.float32))
        padded_w.append(wp)
        padded_b.append(bp)
        prev_out_pad = dout_pad
    n_out_pad = prev_out_pad

    # --- divisor-based batch tiling (bounded padding); >=2 tiles when B>=16 so the
    # 'parallel' batch axis feeds both v7x TensorCores.
    n_b = _cdiv(B, _MAX_B_TILE)
    if B >= 16:
        n_b = max(n_b, 2)
    B_tile = _round_up(_cdiv(B, n_b), _SUBLANE)
    B_pad = n_b * B_tile

    xf = xf.astype(compute_dtype)
    if (B_pad, F_in_pad) != (B, F_in):
        xf = jnp.zeros((B_pad, F_in_pad), compute_dtype).at[:B, :F_in].set(xf)

    grid = (n_b, n_k)
    kernel = functools.partial(_mlp_kernel, num_layer)

    def _build_and_call(single_buffer_params):
        def _const_spec(shape):
            # Constant index_map: Pallas never re-DMAs the block; Buffered(1) also drops
            # the useless second buffer, halving resident-param VMEM.
            if single_buffer_params:
                return pl.BlockSpec(shape, lambda i, k: (0, 0),
                                    pipeline_mode=pl.Buffered(buffer_count=1))
            return pl.BlockSpec(shape, lambda i, k: (0, 0))

        operands = [xf]
        in_specs = [pl.BlockSpec((B_tile, K_tile), lambda i, k: (i, k))]
        for li, (wp, bp) in enumerate(zip(padded_w, padded_b)):
            operands.append(wp)
            if li == 0 and n_k > 1:
                # layer-0 weight streamed in K chunks (double-buffered by Pallas)
                in_specs.append(pl.BlockSpec((K_tile, wp.shape[1]), lambda i, k: (k, 0)))
            else:
                in_specs.append(_const_spec(wp.shape))
            operands.append(bp)
            in_specs.append(_const_spec(bp.shape))
        out_specs = pl.BlockSpec((B_tile, n_out_pad), lambda i, k: (i, 0))

        # --- VMEM budget: resident params counted once (single-buffered), 2x only for
        # the streamed x / w0 / out tiles, plus scratch & f32-intermediate headroom.
        param_buf = 1 if single_buffer_params else 2
        resident_bytes = 0
        streamed_bytes = 2 * (B_tile * K_tile * xf.dtype.itemsize
                              + B_tile * n_out_pad * jnp.dtype(out_dtype).itemsize)
        for li, (wp, bp) in enumerate(zip(padded_w, padded_b)):
            if li == 0 and n_k > 1:
                streamed_bytes += 2 * K_tile * wp.shape[1] * wp.dtype.itemsize
            else:
                resident_bytes += param_buf * wp.size * wp.dtype.itemsize
            resident_bytes += param_buf * bp.size * bp.dtype.itemsize
        acc_bytes = B_tile * out0_pad * 4
        live_bytes = 4 * B_tile * max(out0_pad, n_out_pad) * 4
        vmem_needed = resident_bytes + streamed_bytes + acc_bytes + live_bytes + (8 << 20)
        vmem_limit = int(min(max(vmem_needed, _VMEM_SOFT_CAP), _VMEM_HARD_CAP))

        return pl.pallas_call(
            kernel,
            out_shape=jax.ShapeDtypeStruct((B_pad, n_out_pad), out_dtype),
            grid=grid,
            in_specs=in_specs,
            out_specs=out_specs,
            scratch_shapes=[pltpu.VMEM((B_tile, out0_pad), jnp.float32)],
            compiler_params=pltpu.CompilerParams(
                dimension_semantics=("parallel", "arbitrary"),
                vmem_limit_bytes=vmem_limit,
            ),
        )(*operands)

    try:
        out_padded = _build_and_call(single_buffer_params=True)
    except Exception:
        # pl.Buffered(1) not supported on this JAX version -> fall back to default
        # double-buffered param specs (correctness identical, slightly more VMEM).
        out_padded = _build_and_call(single_buffer_params=False)

    return out_padded[:B, :num_class]


def init_mlp_params(key, in_features, hidden_dim, num_class, num_layer=2):
    """Deterministic synthetic init matching MLP.__init__ layer shapes."""
    dims = []
    in_dim = in_features
    for _ in range(num_layer - 1):
        dims.append((in_dim, hidden_dim))
        in_dim = hidden_dim
    dims.append((in_dim, num_class))   # final Linear(in_dim, num_class)

    weights, biases = [], []
    for (din, dout) in dims:
        key, wk, bk = jax.random.split(key, 3)
        scale = 1.0 / jnp.sqrt(jnp.float32(din))
        weights.append(jax.random.uniform(wk, (din, dout), jnp.float32, -scale, scale))
        biases.append(jax.random.uniform(bk, (dout,), jnp.float32, -scale, scale))
    return weights, biases


if __name__ == "__main__":
    key = jax.random.PRNGKey(0)
    key, xk = jax.random.split(key)

    # feature_size = (4, 16, 16)  ->  in_features = 4*16*16 = 1024
    B, C, H, W = 2, 4, 16, 16
    hidden_dim = 32
    num_class = 8
    num_layer = 2

    x = jax.random.normal(xk, (B, C, H, W), jnp.float32)
    weights, biases = init_mlp_params(key, C * H * W, hidden_dim, num_class, num_layer)

    out = mlp_forward(x, weights, biases, adv=True, adv_lambda=1.0)
    out = jax.block_until_ready(out)

    # reference check in plain JAX (unpadded f32 math); bf16 MXU operands with f32
    # accumulation -> loosened tolerance.
    ref = x.reshape(B, -1)
    for i, (w, b) in enumerate(zip(weights, biases)):
        ref = ref @ w + b
        if i < num_layer - 1:
            ref = jnp.maximum(ref, 0.0)
    assert out.shape == (B, num_class)
    assert jnp.allclose(out, ref, atol=2e-2, rtol=2e-2), (
        f"max abs err {jnp.max(jnp.abs(out - ref))}")

    print("KERNEL_OK")
</pallas_src>

<mosaic_0001>
module attributes {stable_mosaic.version = 11 : i64} {
  func.func @_mlp_kernel(%arg0: i32, %arg1: i32, %arg2: memref<8x1024xbf16, #tpu.memory_space<vmem>>, %arg3: memref<1024x128xbf16, #tpu.memory_space<vmem>>, %arg4: memref<1x128xf32, #tpu.memory_space<vmem>>, %arg5: memref<128x128xbf16, #tpu.memory_space<vmem>>, %arg6: memref<1x128xf32, #tpu.memory_space<vmem>>, %arg7: memref<8x128xf32, #tpu.memory_space<vmem>>, %arg8: memref<8x128xf32, #tpu.memory_space<vmem>>) attributes {dimension_semantics = [#tpu.dimension_semantics<parallel>, #tpu.dimension_semantics<arbitrary>], iteration_bounds = array<i64: 1, 1>, scalar_prefetch = 0 : i64, scratch_operands = 1 : i64, tpu.core_type = #tpu.core_type<tc>, window_params = [{transform_indices = @transform_0, window_bounds = array<i64: 8, 1024>}, {pipeline_mode = #tpu.pipeline_mode<synchronous>, transform_indices = @transform_1, window_bounds = array<i64: 1024, 128>}, {pipeline_mode = #tpu.pipeline_mode<synchronous>, transform_indices = @transform_2, window_bounds = array<i64: 1, 128>}, {pipeline_mode = #tpu.pipeline_mode<synchronous>, transform_indices = @transform_3, window_bounds = array<i64: 128, 128>}, {pipeline_mode = #tpu.pipeline_mode<synchronous>, transform_indices = @transform_4, window_bounds = array<i64: 1, 128>}, {transform_indices = @transform_5, window_bounds = array<i64: 8, 128>}]} {
    %c0_i32 = arith.constant 0 : i32
    %0 = arith.cmpi eq, %arg1, %c0_i32 : i32
    %1 = arith.extui %0 : i1 to i32
    %c0_i32_0 = arith.constant 0 : i32
    %2 = arith.cmpi ne, %1, %c0_i32_0 : i32
    scf.if %2 {
      %cst_10 = arith.constant 0.000000e+00 : f32
      %12 = vector.broadcast %cst_10 : f32 to vector<8x128xf32>
      %c0_11 = arith.constant 0 : index
      %c0_12 = arith.constant 0 : index
      %13 = vector.load %arg8[%c0_11, %c0_12] : memref<8x128xf32, #tpu.memory_space<vmem>>, vector<8x128xf32>
      tpu.vector_store %arg8[%c0_11, %c0_12], %12 {strides = array<i32>} : memref<8x128xf32, #tpu.memory_space<vmem>>, vector<8x128xf32>,
    } else {
    }
    %c0 = arith.constant 0 : index
    %c0_1 = arith.constant 0 : index
    %3 = vector.load %arg8[%c0, %c0_1] : memref<8x128xf32, #tpu.memory_space<vmem>>, vector<8x128xf32>
    %c0_2 = arith.constant 0 : index
    %c0_3 = arith.constant 0 : index
    %4 = vector.load %arg2[%c0_2, %c0_3] : memref<8x1024xbf16, #tpu.memory_space<vmem>>, vector<8x1024xbf16>
    %c0_4 = arith.constant 0 : index
    %c0_5 = arith.constant 0 : index
    %5 = vector.load %arg3[%c0_4, %c0_5] : memref<1024x128xbf16, #tpu.memory_space<vmem>>, vector<1024x128xbf16>
    %cst = arith.constant dense<0.000000e+00> : vector<8x128xf32>
    %6 = tpu.matmul %4, %5, %cst {dimension_numbers = #tpu.dot_dimension_numbers<[1], [0], [0], [1], [0, 0, 1, 1], [], []>} : vector<8x1024xbf16>, vector<1024x128xbf16>, vector<8x128xf32> -> vector<8x128xf32>
    %7 = arith.addf %3, %6 : vector<8x128xf32>
    %c0_6 = arith.constant 0 : index
    %c0_7 = arith.constant 0 : index
    %8 = vector.load %arg8[%c0_6, %c0_7] : memref<8x128xf32, #tpu.memory_space<vmem>>, vector<8x128xf32>
    tpu.vector_store %arg8[%c0_6, %c0_7], %7 {strides = array<i32>} : memref<8x128xf32, #tpu.memory_space<vmem>>, vector<8x128xf32>,
    %c0_i32_8 = arith.constant 0 : i32
    %9 = arith.cmpi eq, %arg1, %c0_i32_8 : i32
    %10 = arith.extui %9 : i1 to i32
    %c0_i32_9 = arith.constant 0 : i32
    %11 = arith.cmpi ne, %10, %c0_i32_9 : i32
    scf.if %11 {
      %c0_10 = arith.constant 0 : index
      %c0_11 = arith.constant 0 : index
      %12 = vector.load %arg8[%c0_10, %c0_11] : memref<8x128xf32, #tpu.memory_space<vmem>>, vector<8x128xf32>
      %c0_12 = arith.constant 0 : index
      %c0_13 = arith.constant 0 : index
      %13 = vector.load %arg4[%c0_12, %c0_13] : memref<1x128xf32, #tpu.memory_space<vmem>>, vector<1x128xf32>
      %14 = vector.broadcast %13 : vector<1x128xf32> to vector<8x128xf32>
      %15 = arith.addf %12, %14 : vector<8x128xf32>
      %cst_14 = arith.constant 0.000000e+00 : f32
      %16 = vector.broadcast %cst_14 : f32 to vector<8x128xf32>
      %17 = arith.maximumf %15, %16 : vector<8x128xf32>
      %c0_15 = arith.constant 0 : index
      %c0_16 = arith.constant 0 : index
      %18 = vector.load %arg5[%c0_15, %c0_16] : memref<128x128xbf16, #tpu.memory_space<vmem>>, vector<128x128xbf16>
      %c0_17 = arith.constant 0 : index
      %c0_18 = arith.constant 0 : index
      %19 = vector.load %arg6[%c0_17, %c0_18] : memref<1x128xf32, #tpu.memory_space<vmem>>, vector<1x128xf32>
      %20 = arith.truncf %17 : vector<8x128xf32> to vector<8x128xbf16>
      %cst_19 = arith.constant dense<0.000000e+00> : vector<8x128xf32>
      %21 = tpu.matmul %20, %18, %cst_19 {dimension_numbers = #tpu.dot_dimension_numbers<[1], [0], [0], [1], [0, 0, 1, 1], [], []>} : vector<8x128xbf16>, vector<128x128xbf16>, vector<8x128xf32> -> vector<8x128xf32>
      %22 = vector.broadcast %19 : vector<1x128xf32> to vector<8x128xf32>
      %23 = arith.addf %21, %22 : vector<8x128xf32>
      %c0_20 = arith.constant 0 : index
      %c0_21 = arith.constant 0 : index
      %24 = vector.load %arg7[%c0_20, %c0_21] : memref<8x128xf32, #tpu.memory_space<vmem>>, vector<8x128xf32>
      tpu.vector_store %arg7[%c0_20, %c0_21], %23 {strides = array<i32>} : memref<8x128xf32, #tpu.memory_space<vmem>>, vector<8x128xf32>,
    } else {
    }
    return
  }
  func.func @transform_0(%arg0: i32, %arg1: i32) -> (i32, i32) {
    %c0_i32 = arith.constant 0 : i32
    return %arg0, %arg1 : i32, i32
  }
  func.func @transform_1(%arg0: i32, %arg1: i32) -> (i32, i32) {
    %c0_i32 = arith.constant 0 : i32
    %c0_i32_0 = arith.constant 0 : i32
    %c0_i32_1 = arith.constant 0 : i32
    return %c0_i32, %c0_i32_0 : i32, i32
  }
  func.func @transform_2(%arg0: i32, %arg1: i32) -> (i32, i32) {
    %c0_i32 = arith.constant 0 : i32
    %c0_i32_0 = arith.constant 0 : i32
    %c0_i32_1 = arith.constant 0 : i32
    return %c0_i32, %c0_i32_0 : i32, i32
  }
  func.func @transform_3(%arg0: i32, %arg1: i32) -> (i32, i32) {
    %c0_i32 = arith.constant 0 : i32
    %c0_i32_0 = arith.constant 0 : i32
    %c0_i32_1 = arith.constant 0 : i32
    return %c0_i32, %c0_i32_0 : i32, i32
  }
  func.func @transform_4(%arg0: i32, %arg1: i32) -> (i32, i32) {
    %c0_i32 = arith.constant 0 : i32
    %c0_i32_0 = arith.constant 0 : i32
    %c0_i32_1 = arith.constant 0 : i32
    return %c0_i32, %c0_i32_0 : i32, i32
  }
  func.func @transform_5(%arg0: i32, %arg1: i32) -> (i32, i32) {
    %c0_i32 = arith.constant 0 : i32
    %c0_i32_0 = arith.constant 0 : i32
    return %arg0, %c0_i32 : i32, i32
  }
}

module attributes {stable_mosaic.version = 11 : i64} {
  func.func @_mlp_kernel(%arg0: i32, %arg1: i32, %arg2: memref<8x1024xbf16, #tpu.memory_space<vmem>>, %arg3: memref<1024x128xbf16, #tpu.memory_space<vmem>>, %arg4: memref<1x128xf32, #tpu.memory_space<vmem>>, %arg5: memref<128x128xbf16, #tpu.memory_space<vmem>>, %arg6: memref<1x128xf32, #tpu.memory_space<vmem>>, %arg7: memref<8x128xf32, #tpu.memory_space<vmem>>, %arg8: memref<8x128xf32, #tpu.memory_space<vmem>>) attributes {dimension_semantics = [#tpu.dimension_semantics<parallel>, #tpu.dimension_semantics<arbitrary>], iteration_bounds = array<i64: 1, 1>, scalar_prefetch = 0 : i64, scratch_operands = 1 : i64, tpu.core_type = #tpu.core_type<tc>, window_params = [{transform_indices = @transform_0, window_bounds = array<i64: 8, 1024>}, {pipeline_mode = #tpu.pipeline_mode<synchronous>, transform_indices = @transform_1, window_bounds = array<i64: 1024, 128>}, {pipeline_mode = #tpu.pipeline_mode<synchronous>, transform_indices = @transform_2, window_bounds = array<i64: 1, 128>}, {pipeline_mode = #tpu.pipeline_mode<synchronous>, transform_indices = @transform_3, window_bounds = array<i64: 128, 128>}, {pipeline_mode = #tpu.pipeline_mode<synchronous>, transform_indices = @transform_4, window_bounds = array<i64: 1, 128>}, {transform_indices = @transform_5, window_bounds = array<i64: 8, 128>}]} {
    %c0_i32 = arith.constant 0 : i32
    %0 = arith.cmpi eq, %arg1, %c0_i32 : i32
    %1 = arith.extui %0 : i1 to i32
    %c0_i32_0 = arith.constant 0 : i32
    %2 = arith.cmpi ne, %1, %c0_i32_0 : i32
    scf.if %2 {
      %cst_10 = arith.constant 0.000000e+00 : f32
      %12 = vector.broadcast %cst_10 : f32 to vector<8x128xf32>
      %c0_11 = arith.constant 0 : index
      %c0_12 = arith.constant 0 : index
      %13 = vector.load %arg8[%c0_11, %c0_12] : memref<8x128xf32, #tpu.memory_space<vmem>>, vector<8x128xf32>
      tpu.vector_store %arg8[%c0_11, %c0_12], %12 {strides = array<i32>} : memref<8x128xf32, #tpu.memory_space<vmem>>, vector<8x128xf32>,
    } else {
    }
    %c0 = arith.constant 0 : index
    %c0_1 = arith.constant 0 : index
    %3 = vector.load %arg8[%c0, %c0_1] : memref<8x128xf32, #tpu.memory_space<vmem>>, vector<8x128xf32>
    %c0_2 = arith.constant 0 : index
    %c0_3 = arith.constant 0 : index
    %4 = vector.load %arg2[%c0_2, %c0_3] : memref<8x1024xbf16, #tpu.memory_space<vmem>>, vector<8x1024xbf16>
    %c0_4 = arith.constant 0 : index
    %c0_5 = arith.constant 0 : index
    %5 = vector.load %arg3[%c0_4, %c0_5] : memref<1024x128xbf16, #tpu.memory_space<vmem>>, vector<1024x128xbf16>
    %cst = arith.constant dense<0.000000e+00> : vector<8x128xf32>
    %6 = tpu.matmul %4, %5, %cst {dimension_numbers = #tpu.dot_dimension_numbers<[1], [0], [0], [1], [0, 0, 1, 1], [], []>} : vector<8x1024xbf16>, vector<1024x128xbf16>, vector<8x128xf32> -> vector<8x128xf32>
    %7 = arith.addf %3, %6 : vector<8x128xf32>
    %c0_6 = arith.constant 0 : index
    %c0_7 = arith.constant 0 : index
    %8 = vector.load %arg8[%c0_6, %c0_7] : memref<8x128xf32, #tpu.memory_space<vmem>>, vector<8x128xf32>
    tpu.vector_store %arg8[%c0_6, %c0_7], %7 {strides = array<i32>} : memref<8x128xf32, #tpu.memory_space<vmem>>, vector<8x128xf32>,
    %c0_i32_8 = arith.constant 0 : i32
    %9 = arith.cmpi eq, %arg1, %c0_i32_8 : i32
    %10 = arith.extui %9 : i1 to i32
    %c0_i32_9 = arith.constant 0 : i32
    %11 = arith.cmpi ne, %10, %c0_i32_9 : i32
    scf.if %11 {
      %c0_10 = arith.constant 0 : index
      %c0_11 = arith.constant 0 : index
      %12 = vector.load %arg8[%c0_10, %c0_11] : memref<8x128xf32, #tpu.memory_space<vmem>>, vector<8x128xf32>
      %c0_12 = arith.constant 0 : index
      %c0_13 = arith.constant 0 : index
      %13 = vector.load %arg4[%c0_12, %c0_13] : memref<1x128xf32, #tpu.memory_space<vmem>>, vector<1x128xf32>
      %14 = vector.broadcast %13 : vector<1x128xf32> to vector<8x128xf32>
      %15 = arith.addf %12, %14 : vector<8x128xf32>
      %cst_14 = arith.constant 0.000000e+00 : f32
      %16 = vector.broadcast %cst_14 : f32 to vector<8x128xf32>
      %17 = arith.maximumf %15, %16 : vector<8x128xf32>
      %c0_15 = arith.constant 0 : index
      %c0_16 = arith.constant 0 : index
      %18 = vector.load %arg5[%c0_15, %c0_16] : memref<128x128xbf16, #tpu.memory_space<vmem>>, vector<128x128xbf16>
      %c0_17 = arith.constant 0 : index
      %c0_18 = arith.constant 0 : index
      %19 = vector.load %arg6[%c0_17, %c0_18] : memref<1x128xf32, #tpu.memory_space<vmem>>, vector<1x128xf32>
      %20 = arith.truncf %17 : vector<8x128xf32> to vector<8x128xbf16>
      %cst_19 = arith.constant dense<0.000000e+00> : vector<8x128xf32>
      %21 = tpu.matmul %20, %18, %cst_19 {dimension_numbers = #tpu.dot_dimension_numbers<[1], [0], [0], [1], [0, 0, 1, 1], [], []>} : vector<8x128xbf16>, vector<128x128xbf16>, vector<8x128xf32> -> vector<8x128xf32>
      %22 = vector.broadcast %19 : vector<1x128xf32> to vector<8x128xf32>
      %23 = arith.addf %21, %22 : vector<8x128xf32>
      %c0_20 = arith.constant 0 : index
      %c0_21 = arith.constant 0 : index
      %24 = vector.load %arg7[%c0_20, %c0_21] : memref<8x128xf32, #tpu.memory_space<vmem>>, vector<8x128xf32>
      tpu.vector_store %arg7[%c0_20, %c0_21], %23 {strides = array<i32>} : memref<8x128xf32, #tpu.memory_space<vmem>>, vector<8x128xf32>,
    } else {
    }
    return
  }
  func.func @transform_0(%arg0: i32, %arg1: i32) -> (i32, i32) {
    %c0_i32 = arith.constant 0 : i32
    return %arg0, %arg1 : i32, i32
  }
  func.func @transform_1(%arg0: i32, %arg1: i32) -> (i32, i32) {
    %c0_i32 = arith.constant 0 : i32
    %c0_i32_0 = arith.constant 0 : i32
    %c0_i32_1 = arith.constant 0 : i32
    return %c0_i32, %c0_i32_0 : i32, i32
  }
  func.func @transform_2(%arg0: i32, %arg1: i32) -> (i32, i32) {
    %c0_i32 = arith.constant 0 : i32
    %c0_i32_0 = arith.constant 0 : i32
    %c0_i32_1 = arith.constant 0 : i32
    return %c0_i32, %c0_i32_0 : i32, i32
  }
  func.func @transform_3(%arg0: i32, %arg1: i32) -> (i32, i32) {
    %c0_i32 = arith.constant 0 : i32
    %c0_i32_0 = arith.constant 0 : i32
    %c0_i32_1 = arith.constant 0 : i32
    return %c0_i32, %c0_i32_0 : i32, i32
  }
  func.func @transform_4(%arg0: i32, %arg1: i32) -> (i32, i32) {
    %c0_i32 = arith.constant 0 : i32
    %c0_i32_0 = arith.constant 0 : i32
    %c0_i32_1 = arith.constant 0 : i32
    return %c0_i32, %c0_i32_0 : i32, i32
  }
  func.func @transform_5(%arg0: i32, %arg1: i32) -> (i32, i32) {
    %c0_i32 = arith.constant 0 : i32
    %c0_i32_0 = arith.constant 0 : i32
    return %arg0, %c0_i32 : i32, i32
  }
}

</mosaic_0001>

<llo_original>
// kernel: tpu_custom_call.1
$region0: #{tpu_custom_call.1}
  #allocation0 [shape = 'u32[]', space=smem, size = 0x4, offset = 0x4, fixed_abs, tag = 'smem constant byte address 0x4 - core index']
  #allocation1 [shape = 'u32[144,128]{1,0:T(1,128)}', space=vmem, size = 0x12000, scoped, tag = 'internal scratch']
  #allocation2 [shape = 'f32[8,128]{1,0:T(8,128)}', space=vmem, size = 0x1000, scoped, tag = 'scratch operand']
  %s0 = inlined_call_operand.hbm [shape: bf16[8,1024], index: 0, kind: input, shape index: {}]
  %s1 = inlined_call_operand.hbm [shape: bf16[1024,128], index: 1, kind: input, shape index: {}]
  %s2 = inlined_call_operand.vmem [shape: f32[1,128], index: 2, kind: input, shape index: {}]
  %s3 = inlined_call_operand.hbm [shape: bf16[128,128], index: 3, kind: input, shape index: {}]
  %s4 = inlined_call_operand.vmem [shape: f32[1,128], index: 4, kind: input, shape index: {}]
  %s5 = inlined_call_operand.hbm [shape: f32[8,128], index: 5, kind: output, shape index: {}]
  %s6 = sld [smem:[#allocation0]]
  $region50: #{tpu_custom_call.1} parent=0
    _
  %s8 = ssub.s32 1, %s6
  %s9 = scalar_select 0, %s8, %s6
  $region1: #{tpu_custom_call.1} parent=0
    #allocation3 [shape = 'u8[16384]{0}', space=vmem, size = 0x4000, scoped, tag = 'input window, operand 0, single buffered']
    #allocation4 [shape = 's32[1]{0}', space=sflag, size = 0x4, scoped, tag = 'scoped memory for tpu_custom_call.1']
    #allocation5 [shape = 's32[1]{0}', space=sflag, size = 0x4, scoped, tag = 'scoped memory for tpu_custom_call.1']
    #allocation6 [shape = 'u8[262144]{0}', space=vmem, size = 0x40000, scoped, tag = 'input window, operand 1, single buffered']
    #allocation7 [shape = 's32[1]{0}', space=sflag, size = 0x4, scoped, tag = 'scoped memory for tpu_custom_call.1']
    #allocation8 [shape = 'u8[32768]{0}', space=vmem, size = 0x8000, scoped, tag = 'input window, operand 3, single buffered']
    #allocation9 [shape = 'u8[4096]{0}', space=vmem, size = 0x1000, scoped, tag = 'output window, operand 0, single buffered']
    %10 = vsyncpa [#allocation4], 0
    %11 = vsyncpa [#allocation7], 0
    %12 = vsyncpa [#allocation5], 0
    // Predicated region
    $region2: #{tpu_custom_call.1} parent=1 // pred_check
      _
    $region3: #{tpu_custom_call.1} parent=1 // pred_check_branch
      %14 = sbr.rel (0) target = $region5
    $region4: #{tpu_custom_call.1} parent=1 // pred_region
      %s16 = ssub.s32 512, 512
      %17 = vsyncadd [#allocation4], %s16
      %s19 = sshll.u32 [#allocation3], 4
      %s20 = int_to_ptr.vmem [resolvable:$true] %s19
      %22 = dma.hbm_to_vmem [thread:$0]  %s0, 512, %s20, [#allocation4]
    $region5: #{tpu_custom_call.1} parent=1 // pred_fallthru
      _
    // Predicated region
    $region6: #{tpu_custom_call.1} parent=1 // pred_check
      _
    $region7: #{tpu_custom_call.1} parent=1 // pred_check_branch
      %24 = sbr.rel (0) target = $region9
    $region8: #{tpu_custom_call.1} parent=1 // pred_region
      %s26 = ssub.s32 8192, 8192
      %27 = vsyncadd [#allocation7], %s26
      %s28 = sshll.u32 [#allocation6], 4
      %s29 = int_to_ptr.vmem [resolvable:$true] %s28
      %34 = dma.hbm_to_vmem [thread:$0]  %s1, 8192, %s29, [#allocation7], 64, 64, 4
    $region9: #{tpu_custom_call.1} parent=1 // pred_fallthru
      _
    // Predicated region
    $region10: #{tpu_custom_call.1} parent=1 // pred_check
      _
    $region11: #{tpu_custom_call.1} parent=1 // pred_check_branch
      %36 = sbr.rel (0) target = $region13
    $region12: #{tpu_custom_call.1} parent=1 // pred_region
      _
    $region13: #{tpu_custom_call.1} parent=1 // pred_fallthru
      _
    // Predicated region
    $region14: #{tpu_custom_call.1} parent=1 // pred_check
      _
    $region15: #{tpu_custom_call.1} parent=1 // pred_check_branch
      %38 = sbr.rel (0) target = $region17
    $region16: #{tpu_custom_call.1} parent=1 // pred_region
      %s40 = ssub.s32 1024, 1024
      %41 = vsyncadd [#allocation7], %s40
      %s42 = sshll.u32 [#allocation8], 4
      %s43 = int_to_ptr.vmem [resolvable:$true] %s42
      %48 = dma.hbm_to_vmem [thread:$0]  %s3, 1024, %s43, [#allocation7], 64, 64, 4
    $region17: #{tpu_custom_call.1} parent=1 // pred_fallthru
      _
    // Predicated region
    $region18: #{tpu_custom_call.1} parent=1 // pred_check
      _
    $region19: #{tpu_custom_call.1} parent=1 // pred_check_branch
      %50 = sbr.rel (0) target = $region21
    $region20: #{tpu_custom_call.1} parent=1 // pred_region
      _
    $region21: #{tpu_custom_call.1} parent=1 // pred_fallthru
      _
    // Predicated region
    $region22: #{tpu_custom_call.1} parent=1 // pred_check
      _
    $region23: #{tpu_custom_call.1} parent=1 // pred_check_branch
      %52 = sbr.rel (0) target = $region25
    $region24: #{tpu_custom_call.1} parent=1 // pred_region
      %53 = dma.done [#allocation4], 512
    $region25: #{tpu_custom_call.1} parent=1 // pred_fallthru
      _
    // Predicated region
    $region26: #{tpu_custom_call.1} parent=1 // pred_check
      _
    $region27: #{tpu_custom_call.1} parent=1 // pred_check_branch
      %55 = sbr.rel (0) target = $region29
    $region28: #{tpu_custom_call.1} parent=1 // pred_region
      %56 = dma.done [#allocation7], 8192
    $region29: #{tpu_custom_call.1} parent=1 // pred_fallthru
      _
    // Predicated region
    $region30: #{tpu_custom_call.1} parent=1 // pred_check
      _
    $region31: #{tpu_custom_call.1} parent=1 // pred_check_branch
      %58 = sbr.rel (0) target = $region33
    $region32: #{tpu_custom_call.1} parent=1 // pred_region
      %59 = dma.done [#allocation7], 1024
    $region33: #{tpu_custom_call.1} parent=1 // pred_fallthru
      _
    %p61 = scmp.eq.s32.totalorder 0, 0
    // Predicated region
    $region34: #{tpu_custom_call.1} parent=1 // pred_check
      %p62 = pneg %p61
    $region35: #{tpu_custom_call.1} parent=1 // pred_check_branch
      %64 = sbr.rel (%p62) target = $region37
    $region36: #{tpu_custom_call.1} parent=1 // pred_region
      %65 = vst [vmem:[#allocation2] sm:$0xff] 0.0
    $region37: #{tpu_custom_call.1} parent=1 // pred_fallthru
      _
    %v66 = vld [vmem:[#allocation2] sm:$0xff]
    %v67 = vld [vmem:[#allocation3] sm:$0xff]
    %v68 = vld [vmem:[#allocation3 + $0x8] sm:$0xff]
    %v69 = vld [vmem:[#allocation3 + $0x10] sm:$0xff]
    %v70 = vld [vmem:[#allocation3 + $0x18] sm:$0xff]
    %v71 = vld [vmem:[#allocation6] sm:$0xf]
    %v72 = vld [vmem:[#allocation6 + $0x4] sm:$0xf]
    %v73 = vld [vmem:[#allocation6 + $0x8] sm:$0xf]
    %v74 = vld [vmem:[#allocation6 + $0xc] sm:$0xf]
    %v75 = vld [vmem:[#allocation6 + $0x10] sm:$0xf]
    %v76 = vld [vmem:[#allocation6 + $0x14] sm:$0xf]
    %v77 = vld [vmem:[#allocation6 + $0x18] sm:$0xf]
    %v78 = vld [vmem:[#allocation6 + $0x1c] sm:$0xf]
    %v79 = vld [vmem:[#allocation6 + $0x20] sm:$0xf]
    %v80 = vld [vmem:[#allocation6 + $0x24] sm:$0xf]
    %v81 = vld [vmem:[#allocation6 + $0x28] sm:$0xf]
    %v82 = vld [vmem:[#allocation6 + $0x2c] sm:$0xf]
    %v83 = vld [vmem:[#allocation6 + $0x30] sm:$0xf]
    %v84 = vld [vmem:[#allocation6 + $0x34] sm:$0xf]
    %v85 = vld [vmem:[#allocation6 + $0x38] sm:$0xf]
    %v86 = vld [vmem:[#allocation6 + $0x3c] sm:$0xf]
    %v87 = vld [vmem:[#allocation6 + $0x40] sm:$0xf]
    %v88 = vld [vmem:[#allocation6 + $0x44] sm:$0xf]
    %v89 = vld [vmem:[#allocation6 + $0x48] sm:$0xf]
    %v90 = vld [vmem:[#allocation6 + $0x4c] sm:$0xf]
    %v91 = vld [vmem:[#allocation6 + $0x50] sm:$0xf]
    %v92 = vld [vmem:[#allocation6 + $0x54] sm:$0xf]
    %v93 = vld [vmem:[#allocation6 + $0x58] sm:$0xf]
    %v94 = vld [vmem:[#allocation6 + $0x5c] sm:$0xf]
    %v95 = vld [vmem:[#allocation6 + $0x60] sm:$0xf]
    %v96 = vld [vmem:[#allocation6 + $0x64] sm:$0xf]
    %v97 = vld [vmem:[#allocation6 + $0x68] sm:$0xf]
    %v98 = vld [vmem:[#allocation6 + $0x6c] sm:$0xf]
    %v99 = vld [vmem:[#allocation6 + $0x70] sm:$0xf]
    %v100 = vld [vmem:[#allocation6 + $0x74] sm:$0xf]
    %v101 = vld [vmem:[#allocation6 + $0x78] sm:$0xf]
    %v102 = vld [vmem:[#allocation6 + $0x7c] sm:$0xf]
    %v103 = vld [vmem:[#allocation6 + $0x80] sm:$0xf]
    %v104 = vld [vmem:[#allocation6 + $0x84] sm:$0xf]
    %v105 = vld [vmem:[#allocation6 + $0x88] sm:$0xf]
    %v106 = vld [vmem:[#allocation6 + $0x8c] sm:$0xf]
    %v107 = vld [vmem:[#allocation6 + $0x90] sm:$0xf]
    %v108 = vld [vmem:[#allocation6 + $0x94] sm:$0xf]
    %v109 = vld [vmem:[#allocation6 + $0x98] sm:$0xf]
    %v110 = vld [vmem:[#allocation6 + $0x9c] sm:$0xf]
    %v111 = vld [vmem:[#allocation6 + $0xa0] sm:$0xf]
    %v112 = vld [vmem:[#allocation6 + $0xa4] sm:$0xf]
    %v113 = vld [vmem:[#allocation6 + $0xa8] sm:$0xf]
    %v114 = vld [vmem:[#allocation6 + $0xac] sm:$0xf]
    %v115 = vld [vmem:[#allocation6 + $0xb0] sm:$0xf]
    %v116 = vld [vmem:[#allocation6 + $0xb4] sm:$0xf]
    %v117 = vld [vmem:[#allocation6 + $0xb8] sm:$0xf]
    %v118 = vld [vmem:[#allocation6 + $0xbc] sm:$0xf]
    %v119 = vld [vmem:[#allocation6 + $0xc0] sm:$0xf]
    %v120 = vld [vmem:[#allocation6 + $0xc4] sm:$0xf]
    %v121 = vld [vmem:[#allocation6 + $0xc8] sm:$0xf]
    %v122 = vld [vmem:[#allocation6 + $0xcc] sm:$0xf]
    %v123 = vld [vmem:[#allocation6 + $0xd0] sm:$0xf]
    %v124 = vld [vmem:[#allocation6 + $0xd4] sm:$0xf]
    %v125 = vld [vmem:[#allocation6 + $0xd8] sm:$0xf]
    %v126 = vld [vmem:[#allocation6 + $0xdc] sm:$0xf]
    %v127 = vld [vmem:[#allocation6 + $0xe0] sm:$0xf]
    %v128 = vld [vmem:[#allocation6 + $0xe4] sm:$0xf]
    %v129 = vld [vmem:[#allocation6 + $0xe8] sm:$0xf]
    %v130 = vld [vmem:[#allocation6 + $0xec] sm:$0xf]
    %v131 = vld [vmem:[#allocation6 + $0xf0] sm:$0xf]
    %v132 = vld [vmem:[#allocation6 + $0xf4] sm:$0xf]
    %v133 = vld [vmem:[#allocation6 + $0xf8] sm:$0xf]
    %v134 = vld [vmem:[#allocation6 + $0xfc] sm:$0xf]
    %v135 = vld [vmem:[#allocation6 + $0x100] sm:$0xf]
    %v136 = vld [vmem:[#allocation6 + $0x104] sm:$0xf]
    %v137 = vld [vmem:[#allocation6 + $0x108] sm:$0xf]
    %v138 = vld [vmem:[#allocation6 + $0x10c] sm:$0xf]
    %v139 = vld [vmem:[#allocation6 + $0x110] sm:$0xf]
    %v140 = vld [vmem:[#allocation6 + $0x114] sm:$0xf]
    %v141 = vld [vmem:[#allocation6 + $0x118] sm:$0xf]
    %v142 = vld [vmem:[#allocation6 + $0x11c] sm:$0xf]
    %v143 = vld [vmem:[#allocation6 + $0x120] sm:$0xf]
    %v144 = vld [vmem:[#allocation6 + $0x124] sm:$0xf]
    %v145 = vld [vmem:[#allocation6 + $0x128] sm:$0xf]
    %v146 = vld [vmem:[#allocation6 + $0x12c] sm:$0xf]
    %v147 = vld [vmem:[#allocation6 + $0x130] sm:$0xf]
    %v148 = vld [vmem:[#allocation6 + $0x134] sm:$0xf]
    %v149 = vld [vmem:[#allocation6 + $0x138] sm:$0xf]
    %v150 = vld [vmem:[#allocation6 + $0x13c] sm:$0xf]
    %v151 = vld [vmem:[#allocation6 + $0x140] sm:$0xf]
    %v152 = vld [vmem:[#allocation6 + $0x144] sm:$0xf]
    %v153 = vld [vmem:[#allocation6 + $0x148] sm:$0xf]
    %v154 = vld [vmem:[#allocation6 + $0x14c] sm:$0xf]
    %v155 = vld [vmem:[#allocation6 + $0x150] sm:$0xf]
    %v156 = vld [vmem:[#allocation6 + $0x154] sm:$0xf]
    %v157 = vld [vmem:[#allocation6 + $0x158] sm:$0xf]
    %v158 = vld [vmem:[#allocation6 + $0x15c] sm:$0xf]
    %v159 = vld [vmem:[#allocation6 + $0x160] sm:$0xf]
    %v160 = vld [vmem:[#allocation6 + $0x164] sm:$0xf]
    %v161 = vld [vmem:[#allocation6 + $0x168] sm:$0xf]
    %v162 = vld [vmem:[#allocation6 + $0x16c] sm:$0xf]
    %v163 = vld [vmem:[#allocation6 + $0x170] sm:$0xf]
    %v164 = vld [vmem:[#allocation6 + $0x174] sm:$0xf]
    %v165 = vld [vmem:[#allocation6 + $0x178] sm:$0xf]
    %v166 = vld [vmem:[#allocation6 + $0x17c] sm:$0xf]
    %v167 = vld [vmem:[#allocation6 + $0x180] sm:$0xf]
    %v168 = vld [vmem:[#allocation6 + $0x184] sm:$0xf]
    %v169 = vld [vmem:[#allocation6 + $0x188] sm:$0xf]
    %v170 = vld [vmem:[#allocation6 + $0x18c] sm:$0xf]
    %v171 = vld [vmem:[#allocation6 + $0x190] sm:$0xf]
    %v172 = vld [vmem:[#allocation6 + $0x194] sm:$0xf]
    %v173 = vld [vmem:[#allocation6 + $0x198] sm:$0xf]
    %v174 = vld [vmem:[#allocation6 + $0x19c] sm:$0xf]
    %v175 = vld [vmem:[#allocation6 + $0x1a0] sm:$0xf]
    %v176 = vld [vmem:[#allocation6 + $0x1a4] sm:$0xf]
    %v177 = vld [vmem:[#allocation6 + $0x1a8] sm:$0xf]
    %v178 = vld [vmem:[#allocation6 + $0x1ac] sm:$0xf]
    %v179 = vld [vmem:[#allocation6 + $0x1b0] sm:$0xf]
    %v180 = vld [vmem:[#allocation6 + $0x1b4] sm:$0xf]
    %v181 = vld [vmem:[#allocation6 + $0x1b8] sm:$0xf]
    %v182 = vld [vmem:[#allocation6 + $0x1bc] sm:$0xf]
    %v183 = vld [vmem:[#allocation6 + $0x1c0] sm:$0xf]
    %v184 = vld [vmem:[#allocation6 + $0x1c4] sm:$0xf]
    %v185 = vld [vmem:[#allocation6 + $0x1c8] sm:$0xf]
    %v186 = vld [vmem:[#allocation6 + $0x1cc] sm:$0xf]
    %v187 = vld [vmem:[#allocation6 + $0x1d0] sm:$0xf]
    %v188 = vld [vmem:[#allocation6 + $0x1d4] sm:$0xf]
    %v189 = vld [vmem:[#allocation6 + $0x1d8] sm:$0xf]
    %v190 = vld [vmem:[#allocation6 + $0x1dc] sm:$0xf]
    %v191 = vld [vmem:[#allocation6 + $0x1e0] sm:$0xf]
    %v192 = vld [vmem:[#allocation6 + $0x1e4] sm:$0xf]
    %v193 = vld [vmem:[#allocation6 + $0x1e8] sm:$0xf]
    %v194 = vld [vmem:[#allocation6 + $0x1ec] sm:$0xf]
    %v195 = vld [vmem:[#allocation6 + $0x1f0] sm:$0xf]
    %v196 = vld [vmem:[#allocation6 + $0x1f4] sm:$0xf]
    %v197 = vld [vmem:[#allocation6 + $0x1f8] sm:$0xf]
    %v198 = vld [vmem:[#allocation6 + $0x1fc] sm:$0xf]
    %v203 = vunpack.c.l.b16 %v67
    %v204 = vunpack.c.h.b16 %v67
    %v205 = vunpack.c.l.b16 %v68
    %v206 = vunpack.c.h.b16 %v68
    %v207 = vunpack.c.l.b16 %v69
    %v208 = vunpack.c.h.b16 %v69
    %v209 = vunpack.c.l.b16 %v70
    %v210 = vunpack.c.h.b16 %v70
    %v211 = vpack.c.b16 %v203, %v203
    %v212 = vpack.c.b16 %v204, %v204
    %v213 = vpack.c.b16 %v205, %v205
    %v214 = vpack.c.b16 %v206, %v206
    %v215 = vpack.c.b16 %v207, %v207
    %v216 = vpack.c.b16 %v208, %v208
    %v217 = vpack.c.b16 %v209, %v209
    %v218 = vpack.c.b16 %v210, %v210
    %v355 = vunpack.c.l.b16 %v71
    %v356 = vunpack.c.l.b16 %v72
    %v357 = vunpack.c.l.b16 %v73
    %v358 = vunpack.c.l.b16 %v74
    %v359 = vunpack.c.l.b16 %v75
    %v360 = vunpack.c.l.b16 %v76
    %v361 = vunpack.c.l.b16 %v77
    %v362 = vunpack.c.l.b16 %v78
    %v363 = vunpack.c.l.b16 %v79
    %v364 = vunpack.c.l.b16 %v80
    %v365 = vunpack.c.l.b16 %v81
    %v366 = vunpack.c.l.b16 %v82
    %v367 = vunpack.c.l.b16 %v83
    %v368 = vunpack.c.l.b16 %v84
    %v369 = vunpack.c.l.b16 %v85
    %v370 = vunpack.c.l.b16 %v86
    %v371 = vunpack.c.l.b16 %v87
    %v372 = vunpack.c.l.b16 %v88
    %v373 = vunpack.c.l.b16 %v89
    %v374 = vunpack.c.l.b16 %v90
    %v375 = vunpack.c.l.b16 %v91
    %v376 = vunpack.c.l.b16 %v92
    %v377 = vunpack.c.l.b16 %v93
    %v378 = vunpack.c.l.b16 %v94
    %v379 = vunpack.c.l.b16 %v95
    %v380 = vunpack.c.l.b16 %v96
    %v381 = vunpack.c.l.b16 %v97
    %v382 = vunpack.c.l.b16 %v98
    %v383 = vunpack.c.l.b16 %v99
    %v384 = vunpack.c.l.b16 %v100
    %v385 = vunpack.c.l.b16 %v101
    %v386 = vunpack.c.l.b16 %v102
    %v387 = vunpack.c.l.b16 %v103
    %v388 = vunpack.c.l.b16 %v104
    %v389 = vunpack.c.l.b16 %v105
    %v390 = vunpack.c.l.b16 %v106
    %v391 = vunpack.c.l.b16 %v107
    %v392 = vunpack.c.l.b16 %v108
    %v393 = vunpack.c.l.b16 %v109
    %v394 = vunpack.c.l.b16 %v110
    %v395 = vunpack.c.l.b16 %v111
    %v396 = vunpack.c.l.b16 %v112
    %v397 = vunpack.c.l.b16 %v113
    %v398 = vunpack.c.l.b16 %v114
    %v399 = vunpack.c.l.b16 %v115
    %v400 = vunpack.c.l.b16 %v116
    %v401 = vunpack.c.l.b16 %v117
    %v402 = vunpack.c.l.b16 %v118
    %v403 = vunpack.c.l.b16 %v119
    %v404 = vunpack.c.l.b16 %v120
    %v405 = vunpack.c.l.b16 %v121
    %v406 = vunpack.c.l.b16 %v122
    %v407 = vunpack.c.l.b16 %v123
    %v408 = vunpack.c.l.b16 %v124
    %v409 = vunpack.c.l.b16 %v125
    %v410 = vunpack.c.l.b16 %v126
    %v411 = vunpack.c.l.b16 %v127
    %v412 = vunpack.c.l.b16 %v128
    %v413 = vunpack.c.l.b16 %v129
    %v414 = vunpack.c.l.b16 %v130
    %v415 = vunpack.c.l.b16 %v131
    %v416 = vunpack.c.l.b16 %v132
    %v417 = vunpack.c.l.b16 %v133
    %v418 = vunpack.c.l.b16 %v134
    %v419 = vunpack.c.l.b16 %v135
    %v420 = vunpack.c.l.b16 %v136
    %v421 = vunpack.c.l.b16 %v137
    %v422 = vunpack.c.l.b16 %v138
    %v423 = vunpack.c.l.b16 %v139
    %v424 = vunpack.c.l.b16 %v140
    %v425 = vunpack.c.l.b16 %v141
    %v426 = vunpack.c.l.b16 %v142
    %v427 = vunpack.c.l.b16 %v143
    %v428 = vunpack.c.l.b16 %v144
    %v429 = vunpack.c.l.b16 %v145
    %v430 = vunpack.c.l.b16 %v146
    %v431 = vunpack.c.l.b16 %v147
    %v432 = vunpack.c.l.b16 %v148
    %v433 = vunpack.c.l.b16 %v149
    %v434 = vunpack.c.l.b16 %v150
    %v435 = vunpack.c.l.b16 %v151
    %v436 = vunpack.c.l.b16 %v152
    %v437 = vunpack.c.l.b16 %v153
    %v438 = vunpack.c.l.b16 %v154
    %v439 = vunpack.c.l.b16 %v155
    %v440 = vunpack.c.l.b16 %v156
    %v441 = vunpack.c.l.b16 %v157
    %v442 = vunpack.c.l.b16 %v158
    %v443 = vunpack.c.l.b16 %v159
    %v444 = vunpack.c.l.b16 %v160
    %v445 = vunpack.c.l.b16 %v161
    %v446 = vunpack.c.l.b16 %v162
    %v447 = vunpack.c.l.b16 %v163
    %v448 = vunpack.c.l.b16 %v164
    %v449 = vunpack.c.l.b16 %v165
    %v450 = vunpack.c.l.b16 %v166
    %v451 = vunpack.c.l.b16 %v167
    %v452 = vunpack.c.l.b16 %v168
    %v453 = vunpack.c.l.b16 %v169
    %v454 = vunpack.c.l.b16 %v170
    %v455 = vunpack.c.l.b16 %v171
    %v456 = vunpack.c.l.b16 %v172
    %v457 = vunpack.c.l.b16 %v173
    %v458 = vunpack.c.l.b16 %v174
    %v459 = vunpack.c.l.b16 %v175
    %v460 = vunpack.c.l.b16 %v176
    %v461 = vunpack.c.l.b16 %v177
    %v462 = vunpack.c.l.b16 %v178
    %v463 = vunpack.c.l.b16 %v179
    %v464 = vunpack.c.l.b16 %v180
    %v465 = vunpack.c.l.b16 %v181
    %v466 = vunpack.c.l.b16 %v182
    %v467 = vunpack.c.l.b16 %v183
    %v468 = vunpack.c.l.b16 %v184
    %v469 = vunpack.c.l.b16 %v185
    %v470 = vunpack.c.l.b16 %v186
    %v471 = vunpack.c.l.b16 %v187
    %v472 = vunpack.c.l.b16 %v188
    %v473 = vunpack.c.l.b16 %v189
    %v474 = vunpack.c.l.b16 %v190
    %v475 = vunpack.c.l.b16 %v191
    %v476 = vunpack.c.l.b16 %v192
    %v477 = vunpack.c.l.b16 %v193
    %v478 = vunpack.c.l.b16 %v194
    %v479 = vunpack.c.l.b16 %v195
    %v480 = vunpack.c.l.b16 %v196
    %v481 = vunpack.c.l.b16 %v197
    %v482 = vunpack.c.l.b16 %v198
    %v483 = vpack.c.b16 %v356, %v355
    %v484 = vpack.c.b16 %v358, %v357
    %v485 = vpack.c.b16 %v360, %v359
    %v486 = vpack.c.b16 %v362, %v361
    %v487 = vpack.c.b16 %v364, %v363
    %v488 = vpack.c.b16 %v366, %v365
    %v489 = vpack.c.b16 %v368, %v367
    %v490 = vpack.c.b16 %v370, %v369
    %v491 = vpack.c.b16 %v372, %v371
    %v492 = vpack.c.b16 %v374, %v373
    %v493 = vpack.c.b16 %v376, %v375
    %v494 = vpack.c.b16 %v378, %v377
    %v495 = vpack.c.b16 %v380, %v379
    %v496 = vpack.c.b16 %v382, %v381
    %v497 = vpack.c.b16 %v384, %v383
    %v498 = vpack.c.b16 %v386, %v385
    %v499 = vpack.c.b16 %v388, %v387
    %v500 = vpack.c.b16 %v390, %v389
    %v501 = vpack.c.b16 %v392, %v391
    %v502 = vpack.c.b16 %v394, %v393
    %v503 = vpack.c.b16 %v396, %v395
    %v504 = vpack.c.b16 %v398, %v397
    %v505 = vpack.c.b16 %v400, %v399
    %v506 = vpack.c.b16 %v402, %v401
    %v507 = vpack.c.b16 %v404, %v403
    %v508 = vpack.c.b16 %v406, %v405
    %v509 = vpack.c.b16 %v408, %v407
    %v510 = vpack.c.b16 %v410, %v409
    %v511 = vpack.c.b16 %v412, %v411
    %v512 = vpack.c.b16 %v414, %v413
    %v513 = vpack.c.b16 %v416, %v415
    %v514 = vpack.c.b16 %v418, %v417
    %v515 = vpack.c.b16 %v420, %v419
    %v516 = vpack.c.b16 %v422, %v421
    %v517 = vpack.c.b16 %v424, %v423
    %v518 = vpack.c.b16 %v426, %v425
    %v519 = vpack.c.b16 %v428, %v427
    %v520 = vpack.c.b16 %v430, %v429
    %v521 = vpack.c.b16 %v432, %v431
    %v522 = vpack.c.b16 %v434, %v433
    %v523 = vpack.c.b16 %v436, %v435
    %v524 = vpack.c.b16 %v438, %v437
    %v525 = vpack.c.b16 %v440, %v439
    %v526 = vpack.c.b16 %v442, %v441
    %v527 = vpack.c.b16 %v444, %v443
    %v528 = vpack.c.b16 %v446, %v445
    %v529 = vpack.c.b16 %v448, %v447
    %v530 = vpack.c.b16 %v450, %v449
    %v531 = vpack.c.b16 %v452, %v451
    %v532 = vpack.c.b16 %v454, %v453
    %v533 = vpack.c.b16 %v456, %v455
    %v534 = vpack.c.b16 %v458, %v457
    %v535 = vpack.c.b16 %v460, %v459
    %v536 = vpack.c.b16 %v462, %v461
    %v537 = vpack.c.b16 %v464, %v463
    %v538 = vpack.c.b16 %v466, %v465
    %v539 = vpack.c.b16 %v468, %v467
    %v540 = vpack.c.b16 %v470, %v469
    %v541 = vpack.c.b16 %v472, %v471
    %v542 = vpack.c.b16 %v474, %v473
    %v543 = vpack.c.b16 %v476, %v475
    %v544 = vpack.c.b16 %v478, %v477
    %v545 = vpack.c.b16 %v480, %v479
    %v546 = vpack.c.b16 %v482, %v481
    %611 = vmatprep.subr.bf16.mxu0 0
    %612 = vmatpush1.bf16.msra.mxu0 %v483
    %613 = vmatprep.subr.bf16.mxu0 0
    %614 = vmatpush1.bf16.msra.mxu0 %v484
    %615 = vmatprep.subr.bf16.mxu0 0
    %616 = vmatpush1.bf16.msra.mxu0 %v485
    %617 = vmatprep.subr.bf16.mxu0 0
    %618 = vmatpush1.bf16.msra.mxu0 %v486
    %619 = vmatprep.subr.bf16.mxu0 0
    %620 = vmatpush1.bf16.msra.mxu0 %v487
    %621 = vmatprep.subr.bf16.mxu0 0
    %622 = vmatpush1.bf16.msra.mxu0 %v488
    %623 = vmatprep.subr.bf16.mxu0 0
    %624 = vmatpush1.bf16.msra.mxu0 %v489
    %625 = vmatprep.subr.bf16.mxu0 0
    %626 = vmatpush1.bf16.msra.mxu0 %v490
    %627 = vmatprep.subr.bf16.mxu0 0
    %628 = vmatpush1.bf16.msra.mxu0 %v491
    %629 = vmatprep.subr.bf16.mxu0 0
    %630 = vmatpush1.bf16.msra.mxu0 %v492
    %631 = vmatprep.subr.bf16.mxu0 0
    %632 = vmatpush1.bf16.msra.mxu0 %v493
    %633 = vmatprep.subr.bf16.mxu0 0
    %634 = vmatpush1.bf16.msra.mxu0 %v494
    %635 = vmatprep.subr.bf16.mxu0 0
    %636 = vmatpush1.bf16.msra.mxu0 %v495
    %637 = vmatprep.subr.bf16.mxu0 0
    %638 = vmatpush1.bf16.msra.mxu0 %v496
    %639 = vmatprep.subr.bf16.mxu0 0
    %640 = vmatpush1.bf16.msra.mxu0 %v497
    %641 = vmatprep.subr.bf16.mxu0 0
    %642 = vmatpush1.bf16.msra.mxu0 %v498
    %643 = vmatprep.mubr.bf16.mxu0 %v212
    %644 = vmatmul.mubr.bf16.gmra.mrb[0].mxu0 %v211
    %v645 = vpop.f32.mrb[0].mxu0
    %v646 = vadd.f32 0.0, %v645
    %v647 = vpop.f32.mrb[0].mxu0
    %v648 = vpop.f32.mrb[0].mxu0
    %v649 = vpop.f32.mrb[0].mxu0
    %650 = vdwg.mxu0
    %651 = vmatprep.subr.bf16.mxu0 0
    %652 = vmatpush1.bf16.msra.mxu0 %v499
    %653 = vmatprep.subr.bf16.mxu0 0
    %654 = vmatpush1.bf16.msra.mxu0 %v500
    %655 = vmatprep.subr.bf16.mxu0 0
    %656 = vmatpush1.bf16.msra.mxu0 %v501
    %657 = vmatprep.subr.bf16.mxu0 0
    %658 = vmatpush1.bf16.msra.mxu0 %v502
    %659 = vmatprep.subr.bf16.mxu0 0
    %660 = vmatpush1.bf16.msra.mxu0 %v503
    %661 = vmatprep.subr.bf16.mxu0 0
    %662 = vmatpush1.bf16.msra.mxu0 %v504
    %663 = vmatprep.subr.bf16.mxu0 0
    %664 = vmatpush1.bf16.msra.mxu0 %v505
    %665 = vmatprep.subr.bf16.mxu0 0
    %666 = vmatpush1.bf16.msra.mxu0 %v506
    %667 = vmatprep.subr.bf16.mxu0 0
    %668 = vmatpush1.bf16.msra.mxu0 %v507
    %669 = vmatprep.subr.bf16.mxu0 0
    %670 = vmatpush1.bf16.msra.mxu0 %v508
    %671 = vmatprep.subr.bf16.mxu0 0
    %672 = vmatpush1.bf16.msra.mxu0 %v509
    %673 = vmatprep.subr.bf16.mxu0 0
    %674 = vmatpush1.bf16.msra.mxu0 %v510
    %675 = vmatprep.subr.bf16.mxu0 0
    %676 = vmatpush1.bf16.msra.mxu0 %v511
    %677 = vmatprep.subr.bf16.mxu0 0
    %678 = vmatpush1.bf16.msra.mxu0 %v512
    %679 = vmatprep.subr.bf16.mxu0 0
    %680 = vmatpush1.bf16.msra.mxu0 %v513
    %681 = vmatprep.subr.bf16.mxu0 0
    %682 = vmatpush1.bf16.msra.mxu0 %v514
    %683 = vmatprep.mubr.bf16.mxu0 %v214
    %684 = vmatmul.mubr.bf16.gmra.mrb[0].mxu0 %v213
    %v685 = vpop.f32.mrb[0].mxu0
    %v686 = vadd.f32 %v646, %v685
    %v687 = vpop.f32.mrb[0].mxu0
    %v688 = vpop.f32.mrb[0].mxu0
    %v689 = vpop.f32.mrb[0].mxu0
    %690 = vdwg.mxu0
    %691 = vmatprep.subr.bf16.mxu0 0
    %692 = vmatpush1.bf16.msra.mxu0 %v515
    %693 = vmatprep.subr.bf16.mxu0 0
    %694 = vmatpush1.bf16.msra.mxu0 %v516
    %695 = vmatprep.subr.bf16.mxu0 0
    %696 = vmatpush1.bf16.msra.mxu0 %v517
    %697 = vmatprep.subr.bf16.mxu0 0
    %698 = vmatpush1.bf16.msra.mxu0 %v518
    %699 = vmatprep.subr.bf16.mxu0 0
    %700 = vmatpush1.bf16.msra.mxu0 %v519
    %701 = vmatprep.subr.bf16.mxu0 0
    %702 = vmatpush1.bf16.msra.mxu0 %v520
    %703 = vmatprep.subr.bf16.mxu0 0
    %704 = vmatpush1.bf16.msra.mxu0 %v521
    %705 = vmatprep.subr.bf16.mxu0 0
    %706 = vmatpush1.bf16.msra.mxu0 %v522
    %707 = vmatprep.subr.bf16.mxu0 0
    %708 = vmatpush1.bf16.msra.mxu0 %v523
    %709 = vmatprep.subr.bf16.mxu0 0
    %710 = vmatpush1.bf16.msra.mxu0 %v524
    %711 = vmatprep.subr.bf16.mxu0 0
    %712 = vmatpush1.bf16.msra.mxu0 %v525
    %713 = vmatprep.subr.bf16.mxu0 0
    %714 = vmatpush1.bf16.msra.mxu0 %v526
    %715 = vmatprep.subr.bf16.mxu0 0
    %716 = vmatpush1.bf16.msra.mxu0 %v527
    %717 = vmatprep.subr.bf16.mxu0 0
    %718 = vmatpush1.bf16.msra.mxu0 %v528
    %719 = vmatprep.subr.bf16.mxu0 0
    %720 = vmatpush1.bf16.msra.mxu0 %v529
    %721 = vmatprep.subr.bf16.mxu0 0
    %722 = vmatpush1.bf16.msra.mxu0 %v530
    %723 = vmatprep.mubr.bf16.mxu0 %v216
    %724 = vmatmul.mubr.bf16.gmra.mrb[0].mxu0 %v215
    %v725 = vpop.f32.mrb[0].mxu0
    %v726 = vadd.f32 %v686, %v725
    %v727 = vpop.f32.mrb[0].mxu0
    %v728 = vpop.f32.mrb[0].mxu0
    %v729 = vpop.f32.mrb[0].mxu0
    %730 = vdwg.mxu0
    %731 = vmatprep.subr.bf16.mxu0 0
    %732 = vmatpush1.bf16.msra.mxu0 %v531
    %733 = vmatprep.subr.bf16.mxu0 0
    %734 = vmatpush1.bf16.msra.mxu0 %v532
    %735 = vmatprep.subr.bf16.mxu0 0
    %736 = vmatpush1.bf16.msra.mxu0 %v533
    %737 = vmatprep.subr.bf16.mxu0 0
    %738 = vmatpush1.bf16.msra.mxu0 %v534
    %739 = vmatprep.subr.bf16.mxu0 0
    %740 = vmatpush1.bf16.msra.mxu0 %v535
    %741 = vmatprep.subr.bf16.mxu0 0
    %742 = vmatpush1.bf16.msra.mxu0 %v536
    %743 = vmatprep.subr.bf16.mxu0 0
    %744 = vmatpush1.bf16.msra.mxu0 %v537
    %745 = vmatprep.subr.bf16.mxu0 0
    %746 = vmatpush1.bf16.msra.mxu0 %v538
    %747 = vmatprep.subr.bf16.mxu0 0
    %748 = vmatpush1.bf16.msra.mxu0 %v539
    %749 = vmatprep.subr.bf16.mxu0 0
    %750 = vmatpush1.bf16.msra.mxu0 %v540
    %751 = vmatprep.subr.bf16.mxu0 0
    %752 = vmatpush1.bf16.msra.mxu0 %v541
    %753 = vmatprep.subr.bf16.mxu0 0
    %754 = vmatpush1.bf16.msra.mxu0 %v542
    %755 = vmatprep.subr.bf16.mxu0 0
    %756 = vmatpush1.bf16.msra.mxu0 %v543
    %757 = vmatprep.subr.bf16.mxu0 0
    %758 = vmatpush1.bf16.msra.mxu0 %v544
    %759 = vmatprep.subr.bf16.mxu0 0
    %760 = vmatpush1.bf16.msra.mxu0 %v545
    %761 = vmatprep.subr.bf16.mxu0 0
    %762 = vmatpush1.bf16.msra.mxu0 %v546
    %763 = vmatprep.mubr.bf16.mxu0 %v218
    %764 = vmatmul.mubr.bf16.gmra.mrb[0].mxu0 %v217
    %v765 = vpop.f32.mrb[0].mxu0
    %v766 = vadd.f32 %v726, %v765
    %v767 = vpop.f32.mrb[0].mxu0
    %v768 = vpop.f32.mrb[0].mxu0
    %v769 = vpop.f32.mrb[0].mxu0
    %770 = vdwg.mxu0
    %v771 = vadd.f32 %v66, %v766
    %772 = vst [vmem:[#allocation2] sm:$0xff] %v771
    // Predicated region
    $region38: #{tpu_custom_call.1} parent=1 // pred_check
      %p773 = pneg %p61
    $region39: #{tpu_custom_call.1} parent=1 // pred_check_branch
      %775 = sbr.rel (%p773) target = $region41
    $region40: #{tpu_custom_call.1} parent=1 // pred_region
      %v776 = vld [vmem:[#allocation2] sm:$0xff]
      %v777 = vld [vmem:[%s2] sm:$0x1]
      %v779 = vlaneseq
      %v780 = vshrl.u32 %v779, 7
      %v781 = vsub.s32 0, %v780
      %v782 = vrot.slane %v777, %v781
      %v784 = vadd.f32 %v776, %v782
      %v785 = vmax.f32 %v784, 0.0
      %v786 = vld [vmem:[#allocation8] sm:$0xf]
      %v787 = vld [vmem:[#allocation8 + $0x4] sm:$0xf]
      %v788 = vld [vmem:[#allocation8 + $0x8] sm:$0xf]
      %v789 = vld [vmem:[#allocation8 + $0xc] sm:$0xf]
      %v790 = vld [vmem:[#allocation8 + $0x10] sm:$0xf]
      %v791 = vld [vmem:[#allocation8 + $0x14] sm:$0xf]
      %v792 = vld [vmem:[#allocation8 + $0x18] sm:$0xf]
      %v793 = vld [vmem:[#allocation8 + $0x1c] sm:$0xf]
      %v794 = vld [vmem:[#allocation8 + $0x20] sm:$0xf]
      %v795 = vld [vmem:[#allocation8 + $0x24] sm:$0xf]
      %v796 = vld [vmem:[#allocation8 + $0x28] sm:$0xf]
      %v797 = vld [vmem:[#allocation8 + $0x2c] sm:$0xf]
      %v798 = vld [vmem:[#allocation8 + $0x30] sm:$0xf]
      %v799 = vld [vmem:[#allocation8 + $0x34] sm:$0xf]
      %v800 = vld [vmem:[#allocation8 + $0x38] sm:$0xf]
      %v801 = vld [vmem:[#allocation8 + $0x3c] sm:$0xf]
      %v802 = vld [vmem:[%s4] sm:$0x1]
      %v803 = vpack.c.bf16 %v785, %v785
      %v805 = vlaneseq
      %v806 = vshrl.u32 %v805, 7
      %v807 = vsub.s32 0, %v806
      %v808 = vrot.slane %v802, %v807
      %v826 = vunpack.c.l.b16 %v786
      %v827 = vunpack.c.l.b16 %v787
      %v828 = vunpack.c.l.b16 %v788
      %v829 = vunpack.c.l.b16 %v789
      %v830 = vunpack.c.l.b16 %v790
      %v831 = vunpack.c.l.b16 %v791
      %v832 = vunpack.c.l.b16 %v792
      %v833 = vunpack.c.l.b16 %v793
      %v834 = vunpack.c.l.b16 %v794
      %v835 = vunpack.c.l.b16 %v795
      %v836 = vunpack.c.l.b16 %v796
      %v837 = vunpack.c.l.b16 %v797
      %v838 = vunpack.c.l.b16 %v798
      %v839 = vunpack.c.l.b16 %v799
      %v840 = vunpack.c.l.b16 %v800
      %v841 = vunpack.c.l.b16 %v801
      %v842 = vpack.c.b16 %v827, %v826
      %v843 = vpack.c.b16 %v829, %v828
      %v844 = vpack.c.b16 %v831, %v830
      %v845 = vpack.c.b16 %v833, %v832
      %v846 = vpack.c.b16 %v835, %v834
      %v847 = vpack.c.b16 %v837, %v836
      %v848 = vpack.c.b16 %v839, %v838
      %v849 = vpack.c.b16 %v841, %v840
      %858 = vmatprep.subr.bf16.mxu0 0
      %859 = vmatpush1.bf16.msra.mxu0 %v842
      %860 = vmatprep.subr.bf16.mxu0 0
      %861 = vmatpush1.bf16.msra.mxu0 %v843
      %862 = vmatprep.subr.bf16.mxu0 0
      %863 = vmatpush1.bf16.msra.mxu0 %v844
      %864 = vmatprep.subr.bf16.mxu0 0
      %865 = vmatpush1.bf16.msra.mxu0 %v845
      %866 = vmatprep.subr.bf16.mxu0 0
      %867 = vmatpush1.bf16.msra.mxu0 %v846
      %868 = vmatprep.subr.bf16.mxu0 0
      %869 = vmatpush1.bf16.msra.mxu0 %v847
      %870 = vmatprep.subr.bf16.mxu0 0
      %871 = vmatpush1.bf16.msra.mxu0 %v848
      %872 = vmatprep.subr.bf16.mxu0 0
      %873 = vmatpush1.bf16.msra.mxu0 %v849
      %874 = vmatprep.subr.bf16.mxu0 0
      %875 = vmatpush1.bf16.msra.mxu0 0
      %876 = vmatprep.subr.bf16.mxu0 0
      %877 = vmatpush1.bf16.msra.mxu0 0
      %878 = vmatprep.subr.bf16.mxu0 0
      %879 = vmatpush1.bf16.msra.mxu0 0
      %880 = vmatprep.subr.bf16.mxu0 0
      %881 = vmatpush1.bf16.msra.mxu0 0
      %882 = vmatprep.subr.bf16.mxu0 0
      %883 = vmatpush1.bf16.msra.mxu0 0
      %884 = vmatprep.subr.bf16.mxu0 0
      %885 = vmatpush1.bf16.msra.mxu0 0
      %886 = vmatprep.subr.bf16.mxu0 0
      %887 = vmatpush1.bf16.msra.mxu0 0
      %888 = vmatprep.subr.bf16.mxu0 0
      %889 = vmatpush1.bf16.msra.mxu0 0
      %890 = vmatprep.mubr.bf16.mxu0 0
      %891 = vmatmul.mubr.bf16.gmra.mrb[0].mxu0 %v803
      %v892 = vpop.f32.mrb[0].mxu0
      %v893 = vadd.f32 %v808, %v892
      %v894 = vpop.f32.mrb[0].mxu0
      %v895 = vpop.f32.mrb[0].mxu0
      %v896 = vpop.f32.mrb[0].mxu0
      %897 = vdwg.mxu0
      %898 = vst [vmem:[#allocation9] sm:$0xff] %v893
    $region41: #{tpu_custom_call.1} parent=1 // pred_fallthru
      _
    // Predicated region
    $region42: #{tpu_custom_call.1} parent=1 // pred_check
      _
    $region43: #{tpu_custom_call.1} parent=1 // pred_check_branch
      %900 = sbr.rel (0) target = $region45
    $region44: #{tpu_custom_call.1} parent=1 // pred_region
      %s902 = ssub.s32 128, 128
      %903 = vsyncadd [#allocation5], %s902
      %s905 = sshll.u32 [#allocation9], 4
      %s906 = int_to_ptr.vmem [resolvable:$true] %s905
      %908 = dma.vmem_to_hbm [thread:$0]  %s906, 128, %s5, [#allocation5]
    $region45: #{tpu_custom_call.1} parent=1 // pred_fallthru
      _
    // Predicated region
    $region46: #{tpu_custom_call.1} parent=1 // pred_check
      _
    $region47: #{tpu_custom_call.1} parent=1 // pred_check_branch
      %910 = sbr.rel (0) target = $region49
    $region48: #{tpu_custom_call.1} parent=1 // pred_region
      %911 = dma.done [#allocation5], 128
    $region49: #{tpu_custom_call.1} parent=1 // pred_fallthru
      _
    %912 = vsyncpa [#allocation4], 1
    %913 = vsyncpa [#allocation7], 1
    %914 = vsyncpa [#allocation5], 1

// kernel: tpu_custom_call.1
$region0: #{tpu_custom_call.1}
  #allocation0 [shape = 'u32[]', space=smem, size = 0x4, offset = 0x4, fixed_abs, tag = 'smem constant byte address 0x4 - core index']
  #allocation1 [shape = 'u32[144,128]{1,0:T(1,128)}', space=vmem, size = 0x12000, scoped, tag = 'internal scratch']
  #allocation2 [shape = 'f32[8,128]{1,0:T(8,128)}', space=vmem, size = 0x1000, scoped, tag = 'scratch operand']
  %s0 = inlined_call_operand.hbm [shape: bf16[8,1024], index: 0, kind: input, shape index: {}]
  %s1 = inlined_call_operand.hbm [shape: bf16[1024,128], index: 1, kind: input, shape index: {}]
  %s2 = inlined_call_operand.vmem [shape: f32[1,128], index: 2, kind: input, shape index: {}]
  %s3 = inlined_call_operand.hbm [shape: bf16[128,128], index: 3, kind: input, shape index: {}]
  %s4 = inlined_call_operand.vmem [shape: f32[1,128], index: 4, kind: input, shape index: {}]
  %s5 = inlined_call_operand.hbm [shape: f32[8,128], index: 5, kind: output, shape index: {}]
  %s6 = sld [smem:[#allocation0]]
  $region50: #{tpu_custom_call.1} parent=0
    _
  %s8 = ssub.s32 1, %s6
  %s9 = scalar_select 0, %s8, %s6
  $region1: #{tpu_custom_call.1} parent=0
    #allocation3 [shape = 'u8[16384]{0}', space=vmem, size = 0x4000, scoped, tag = 'input window, operand 0, single buffered']
    #allocation4 [shape = 's32[1]{0}', space=sflag, size = 0x4, scoped, tag = 'scoped memory for tpu_custom_call.1']
    #allocation5 [shape = 's32[1]{0}', space=sflag, size = 0x4, scoped, tag = 'scoped memory for tpu_custom_call.1']
    #allocation6 [shape = 'u8[262144]{0}', space=vmem, size = 0x40000, scoped, tag = 'input window, operand 1, single buffered']
    #allocation7 [shape = 's32[1]{0}', space=sflag, size = 0x4, scoped, tag = 'scoped memory for tpu_custom_call.1']
    #allocation8 [shape = 'u8[32768]{0}', space=vmem, size = 0x8000, scoped, tag = 'input window, operand 3, single buffered']
    #allocation9 [shape = 'u8[4096]{0}', space=vmem, size = 0x1000, scoped, tag = 'output window, operand 0, single buffered']
    %10 = vsyncpa [#allocation4], 0
    %11 = vsyncpa [#allocation7], 0
    %12 = vsyncpa [#allocation5], 0
    // Predicated region
    $region2: #{tpu_custom_call.1} parent=1 // pred_check
      _
    $region3: #{tpu_custom_call.1} parent=1 // pred_check_branch
      %14 = sbr.rel (0) target = $region5
    $region4: #{tpu_custom_call.1} parent=1 // pred_region
      %s16 = ssub.s32 512, 512
      %17 = vsyncadd [#allocation4], %s16
      %s19 = sshll.u32 [#allocation3], 4
      %s20 = int_to_ptr.vmem [resolvable:$true] %s19
      %22 = dma.hbm_to_vmem [thread:$0]  %s0, 512, %s20, [#allocation4]
    $region5: #{tpu_custom_call.1} parent=1 // pred_fallthru
      _
    // Predicated region
    $region6: #{tpu_custom_call.1} parent=1 // pred_check
      _
    $region7: #{tpu_custom_call.1} parent=1 // pred_check_branch
      %24 = sbr.rel (0) target = $region9
    $region8: #{tpu_custom_call.1} parent=1 // pred_region
      %s26 = ssub.s32 8192, 8192
      %27 = vsyncadd [#allocation7], %s26
      %s28 = sshll.u32 [#allocation6], 4
      %s29 = int_to_ptr.vmem [resolvable:$true] %s28
      %34 = dma.hbm_to_vmem [thread:$0]  %s1, 8192, %s29, [#allocation7], 64, 64, 4
    $region9: #{tpu_custom_call.1} parent=1 // pred_fallthru
      _
    // Predicated region
    $region10: #{tpu_custom_call.1} parent=1 // pred_check
      _
    $region11: #{tpu_custom_call.1} parent=1 // pred_check_branch
      %36 = sbr.rel (0) target = $region13
    $region12: #{tpu_custom_call.1} parent=1 // pred_region
      _
    $region13: #{tpu_custom_call.1} parent=1 // pred_fallthru
      _
    // Predicated region
    $region14: #{tpu_custom_call.1} parent=1 // pred_check
      _
    $region15: #{tpu_custom_call.1} parent=1 // pred_check_branch
      %38 = sbr.rel (0) target = $region17
    $region16: #{tpu_custom_call.1} parent=1 // pred_region
      %s40 = ssub.s32 1024, 1024
      %41 = vsyncadd [#allocation7], %s40
      %s42 = sshll.u32 [#allocation8], 4
      %s43 = int_to_ptr.vmem [resolvable:$true] %s42
      %48 = dma.hbm_to_vmem [thread:$0]  %s3, 1024, %s43, [#allocation7], 64, 64, 4
    $region17: #{tpu_custom_call.1} parent=1 // pred_fallthru
      _
    // Predicated region
    $region18: #{tpu_custom_call.1} parent=1 // pred_check
      _
    $region19: #{tpu_custom_call.1} parent=1 // pred_check_branch
      %50 = sbr.rel (0) target = $region21
    $region20: #{tpu_custom_call.1} parent=1 // pred_region
      _
    $region21: #{tpu_custom_call.1} parent=1 // pred_fallthru
      _
    // Predicated region
    $region22: #{tpu_custom_call.1} parent=1 // pred_check
      _
    $region23: #{tpu_custom_call.1} parent=1 // pred_check_branch
      %52 = sbr.rel (0) target = $region25
    $region24: #{tpu_custom_call.1} parent=1 // pred_region
      %53 = dma.done [#allocation4], 512
    $region25: #{tpu_custom_call.1} parent=1 // pred_fallthru
      _
    // Predicated region
    $region26: #{tpu_custom_call.1} parent=1 // pred_check
      _
    $region27: #{tpu_custom_call.1} parent=1 // pred_check_branch
      %55 = sbr.rel (0) target = $region29
    $region28: #{tpu_custom_call.1} parent=1 // pred_region
      %56 = dma.done [#allocation7], 8192
    $region29: #{tpu_custom_call.1} parent=1 // pred_fallthru
      _
    // Predicated region
    $region30: #{tpu_custom_call.1} parent=1 // pred_check
      _
    $region31: #{tpu_custom_call.1} parent=1 // pred_check_branch
      %58 = sbr.rel (0) target = $region33
    $region32: #{tpu_custom_call.1} parent=1 // pred_region
      %59 = dma.done [#allocation7], 1024
    $region33: #{tpu_custom_call.1} parent=1 // pred_fallthru
      _
    %p61 = scmp.eq.s32.totalorder 0, 0
    // Predicated region
    $region34: #{tpu_custom_call.1} parent=1 // pred_check
      %p62 = pneg %p61
    $region35: #{tpu_custom_call.1} parent=1 // pred_check_branch
      %64 = sbr.rel (%p62) target = $region37
    $region36: #{tpu_custom_call.1} parent=1 // pred_region
      %65 = vst [vmem:[#allocation2] sm:$0xff] 0.0
    $region37: #{tpu_custom_call.1} parent=1 // pred_fallthru
      _
    %v66 = vld [vmem:[#allocation2] sm:$0xff]
    %v67 = vld [vmem:[#allocation3] sm:$0xff]
    %v68 = vld [vmem:[#allocation3 + $0x8] sm:$0xff]
    %v69 = vld [vmem:[#allocation3 + $0x10] sm:$0xff]
    %v70 = vld [vmem:[#allocation3 + $0x18] sm:$0xff]
    %v71 = vld [vmem:[#allocation6] sm:$0xf]
    %v72 = vld [vmem:[#allocation6 + $0x4] sm:$0xf]
    %v73 = vld [vmem:[#allocation6 + $0x8] sm:$0xf]
    %v74 = vld [vmem:[#allocation6 + $0xc] sm:$0xf]
    %v75 = vld [vmem:[#allocation6 + $0x10] sm:$0xf]
    %v76 = vld [vmem:[#allocation6 + $0x14] sm:$0xf]
    %v77 = vld [vmem:[#allocation6 + $0x18] sm:$0xf]
    %v78 = vld [vmem:[#allocation6 + $0x1c] sm:$0xf]
    %v79 = vld [vmem:[#allocation6 + $0x20] sm:$0xf]
    %v80 = vld [vmem:[#allocation6 + $0x24] sm:$0xf]
    %v81 = vld [vmem:[#allocation6 + $0x28] sm:$0xf]
    %v82 = vld [vmem:[#allocation6 + $0x2c] sm:$0xf]
    %v83 = vld [vmem:[#allocation6 + $0x30] sm:$0xf]
    %v84 = vld [vmem:[#allocation6 + $0x34] sm:$0xf]
    %v85 = vld [vmem:[#allocation6 + $0x38] sm:$0xf]
    %v86 = vld [vmem:[#allocation6 + $0x3c] sm:$0xf]
    %v87 = vld [vmem:[#allocation6 + $0x40] sm:$0xf]
    %v88 = vld [vmem:[#allocation6 + $0x44] sm:$0xf]
    %v89 = vld [vmem:[#allocation6 + $0x48] sm:$0xf]
    %v90 = vld [vmem:[#allocation6 + $0x4c] sm:$0xf]
    %v91 = vld [vmem:[#allocation6 + $0x50] sm:$0xf]
    %v92 = vld [vmem:[#allocation6 + $0x54] sm:$0xf]
    %v93 = vld [vmem:[#allocation6 + $0x58] sm:$0xf]
    %v94 = vld [vmem:[#allocation6 + $0x5c] sm:$0xf]
    %v95 = vld [vmem:[#allocation6 + $0x60] sm:$0xf]
    %v96 = vld [vmem:[#allocation6 + $0x64] sm:$0xf]
    %v97 = vld [vmem:[#allocation6 + $0x68] sm:$0xf]
    %v98 = vld [vmem:[#allocation6 + $0x6c] sm:$0xf]
    %v99 = vld [vmem:[#allocation6 + $0x70] sm:$0xf]
    %v100 = vld [vmem:[#allocation6 + $0x74] sm:$0xf]
    %v101 = vld [vmem:[#allocation6 + $0x78] sm:$0xf]
    %v102 = vld [vmem:[#allocation6 + $0x7c] sm:$0xf]
    %v103 = vld [vmem:[#allocation6 + $0x80] sm:$0xf]
    %v104 = vld [vmem:[#allocation6 + $0x84] sm:$0xf]
    %v105 = vld [vmem:[#allocation6 + $0x88] sm:$0xf]
    %v106 = vld [vmem:[#allocation6 + $0x8c] sm:$0xf]
    %v107 = vld [vmem:[#allocation6 + $0x90] sm:$0xf]
    %v108 = vld [vmem:[#allocation6 + $0x94] sm:$0xf]
    %v109 = vld [vmem:[#allocation6 + $0x98] sm:$0xf]
    %v110 = vld [vmem:[#allocation6 + $0x9c] sm:$0xf]
    %v111 = vld [vmem:[#allocation6 + $0xa0] sm:$0xf]
    %v112 = vld [vmem:[#allocation6 + $0xa4] sm:$0xf]
    %v113 = vld [vmem:[#allocation6 + $0xa8] sm:$0xf]
    %v114 = vld [vmem:[#allocation6 + $0xac] sm:$0xf]
    %v115 = vld [vmem:[#allocation6 + $0xb0] sm:$0xf]
    %v116 = vld [vmem:[#allocation6 + $0xb4] sm:$0xf]
    %v117 = vld [vmem:[#allocation6 + $0xb8] sm:$0xf]
    %v118 = vld [vmem:[#allocation6 + $0xbc] sm:$0xf]
    %v119 = vld [vmem:[#allocation6 + $0xc0] sm:$0xf]
    %v120 = vld [vmem:[#allocation6 + $0xc4] sm:$0xf]
    %v121 = vld [vmem:[#allocation6 + $0xc8] sm:$0xf]
    %v122 = vld [vmem:[#allocation6 + $0xcc] sm:$0xf]
    %v123 = vld [vmem:[#allocation6 + $0xd0] sm:$0xf]
    %v124 = vld [vmem:[#allocation6 + $0xd4] sm:$0xf]
    %v125 = vld [vmem:[#allocation6 + $0xd8] sm:$0xf]
    %v126 = vld [vmem:[#allocation6 + $0xdc] sm:$0xf]
    %v127 = vld [vmem:[#allocation6 + $0xe0] sm:$0xf]
    %v128 = vld [vmem:[#allocation6 + $0xe4] sm:$0xf]
    %v129 = vld [vmem:[#allocation6 + $0xe8] sm:$0xf]
    %v130 = vld [vmem:[#allocation6 + $0xec] sm:$0xf]
    %v131 = vld [vmem:[#allocation6 + $0xf0] sm:$0xf]
    %v132 = vld [vmem:[#allocation6 + $0xf4] sm:$0xf]
    %v133 = vld [vmem:[#allocation6 + $0xf8] sm:$0xf]
    %v134 = vld [vmem:[#allocation6 + $0xfc] sm:$0xf]
    %v135 = vld [vmem:[#allocation6 + $0x100] sm:$0xf]
    %v136 = vld [vmem:[#allocation6 + $0x104] sm:$0xf]
    %v137 = vld [vmem:[#allocation6 + $0x108] sm:$0xf]
    %v138 = vld [vmem:[#allocation6 + $0x10c] sm:$0xf]
    %v139 = vld [vmem:[#allocation6 + $0x110] sm:$0xf]
    %v140 = vld [vmem:[#allocation6 + $0x114] sm:$0xf]
    %v141 = vld [vmem:[#allocation6 + $0x118] sm:$0xf]
    %v142 = vld [vmem:[#allocation6 + $0x11c] sm:$0xf]
    %v143 = vld [vmem:[#allocation6 + $0x120] sm:$0xf]
    %v144 = vld [vmem:[#allocation6 + $0x124] sm:$0xf]
    %v145 = vld [vmem:[#allocation6 + $0x128] sm:$0xf]
    %v146 = vld [vmem:[#allocation6 + $0x12c] sm:$0xf]
    %v147 = vld [vmem:[#allocation6 + $0x130] sm:$0xf]
    %v148 = vld [vmem:[#allocation6 + $0x134] sm:$0xf]
    %v149 = vld [vmem:[#allocation6 + $0x138] sm:$0xf]
    %v150 = vld [vmem:[#allocation6 + $0x13c] sm:$0xf]
    %v151 = vld [vmem:[#allocation6 + $0x140] sm:$0xf]
    %v152 = vld [vmem:[#allocation6 + $0x144] sm:$0xf]
    %v153 = vld [vmem:[#allocation6 + $0x148] sm:$0xf]
    %v154 = vld [vmem:[#allocation6 + $0x14c] sm:$0xf]
    %v155 = vld [vmem:[#allocation6 + $0x150] sm:$0xf]
    %v156 = vld [vmem:[#allocation6 + $0x154] sm:$0xf]
    %v157 = vld [vmem:[#allocation6 + $0x158] sm:$0xf]
    %v158 = vld [vmem:[#allocation6 + $0x15c] sm:$0xf]
    %v159 = vld [vmem:[#allocation6 + $0x160] sm:$0xf]
    %v160 = vld [vmem:[#allocation6 + $0x164] sm:$0xf]
    %v161 = vld [vmem:[#allocation6 + $0x168] sm:$0xf]
    %v162 = vld [vmem:[#allocation6 + $0x16c] sm:$0xf]
    %v163 = vld [vmem:[#allocation6 + $0x170] sm:$0xf]
    %v164 = vld [vmem:[#allocation6 + $0x174] sm:$0xf]
    %v165 = vld [vmem:[#allocation6 + $0x178] sm:$0xf]
    %v166 = vld [vmem:[#allocation6 + $0x17c] sm:$0xf]
    %v167 = vld [vmem:[#allocation6 + $0x180] sm:$0xf]
    %v168 = vld [vmem:[#allocation6 + $0x184] sm:$0xf]
    %v169 = vld [vmem:[#allocation6 + $0x188] sm:$0xf]
    %v170 = vld [vmem:[#allocation6 + $0x18c] sm:$0xf]
    %v171 = vld [vmem:[#allocation6 + $0x190] sm:$0xf]
    %v172 = vld [vmem:[#allocation6 + $0x194] sm:$0xf]
    %v173 = vld [vmem:[#allocation6 + $0x198] sm:$0xf]
    %v174 = vld [vmem:[#allocation6 + $0x19c] sm:$0xf]
    %v175 = vld [vmem:[#allocation6 + $0x1a0] sm:$0xf]
    %v176 = vld [vmem:[#allocation6 + $0x1a4] sm:$0xf]
    %v177 = vld [vmem:[#allocation6 + $0x1a8] sm:$0xf]
    %v178 = vld [vmem:[#allocation6 + $0x1ac] sm:$0xf]
    %v179 = vld [vmem:[#allocation6 + $0x1b0] sm:$0xf]
    %v180 = vld [vmem:[#allocation6 + $0x1b4] sm:$0xf]
    %v181 = vld [vmem:[#allocation6 + $0x1b8] sm:$0xf]
    %v182 = vld [vmem:[#allocation6 + $0x1bc] sm:$0xf]
    %v183 = vld [vmem:[#allocation6 + $0x1c0] sm:$0xf]
    %v184 = vld [vmem:[#allocation6 + $0x1c4] sm:$0xf]
    %v185 = vld [vmem:[#allocation6 + $0x1c8] sm:$0xf]
    %v186 = vld [vmem:[#allocation6 + $0x1cc] sm:$0xf]
    %v187 = vld [vmem:[#allocation6 + $0x1d0] sm:$0xf]
    %v188 = vld [vmem:[#allocation6 + $0x1d4] sm:$0xf]
    %v189 = vld [vmem:[#allocation6 + $0x1d8] sm:$0xf]
    %v190 = vld [vmem:[#allocation6 + $0x1dc] sm:$0xf]
    %v191 = vld [vmem:[#allocation6 + $0x1e0] sm:$0xf]
    %v192 = vld [vmem:[#allocation6 + $0x1e4] sm:$0xf]
    %v193 = vld [vmem:[#allocation6 + $0x1e8] sm:$0xf]
    %v194 = vld [vmem:[#allocation6 + $0x1ec] sm:$0xf]
    %v195 = vld [vmem:[#allocation6 + $0x1f0] sm:$0xf]
    %v196 = vld [vmem:[#allocation6 + $0x1f4] sm:$0xf]
    %v197 = vld [vmem:[#allocation6 + $0x1f8] sm:$0xf]
    %v198 = vld [vmem:[#allocation6 + $0x1fc] sm:$0xf]
    %v203 = vunpack.c.l.b16 %v67
    %v204 = vunpack.c.h.b16 %v67
    %v205 = vunpack.c.l.b16 %v68
    %v206 = vunpack.c.h.b16 %v68
    %v207 = vunpack.c.l.b16 %v69
    %v208 = vunpack.c.h.b16 %v69
    %v209 = vunpack.c.l.b16 %v70
    %v210 = vunpack.c.h.b16 %v70
    %v211 = vpack.c.b16 %v203, %v203
    %v212 = vpack.c.b16 %v204, %v204
    %v213 = vpack.c.b16 %v205, %v205
    %v214 = vpack.c.b16 %v206, %v206
    %v215 = vpack.c.b16 %v207, %v207
    %v216 = vpack.c.b16 %v208, %v208
    %v217 = vpack.c.b16 %v209, %v209
    %v218 = vpack.c.b16 %v210, %v210
    %v355 = vunpack.c.l.b16 %v71
    %v356 = vunpack.c.l.b16 %v72
    %v357 = vunpack.c.l.b16 %v73
    %v358 = vunpack.c.l.b16 %v74
    %v359 = vunpack.c.l.b16 %v75
    %v360 = vunpack.c.l.b16 %v76
    %v361 = vunpack.c.l.b16 %v77
    %v362 = vunpack.c.l.b16 %v78
    %v363 = vunpack.c.l.b16 %v79
    %v364 = vunpack.c.l.b16 %v80
    %v365 = vunpack.c.l.b16 %v81
    %v366 = vunpack.c.l.b16 %v82
    %v367 = vunpack.c.l.b16 %v83
    %v368 = vunpack.c.l.b16 %v84
    %v369 = vunpack.c.l.b16 %v85
    %v370 = vunpack.c.l.b16 %v86
    %v371 = vunpack.c.l.b16 %v87
    %v372 = vunpack.c.l.b16 %v88
    %v373 = vunpack.c.l.b16 %v89
    %v374 = vunpack.c.l.b16 %v90
    %v375 = vunpack.c.l.b16 %v91
    %v376 = vunpack.c.l.b16 %v92
    %v377 = vunpack.c.l.b16 %v93
    %v378 = vunpack.c.l.b16 %v94
    %v379 = vunpack.c.l.b16 %v95
    %v380 = vunpack.c.l.b16 %v96
    %v381 = vunpack.c.l.b16 %v97
    %v382 = vunpack.c.l.b16 %v98
    %v383 = vunpack.c.l.b16 %v99
    %v384 = vunpack.c.l.b16 %v100
    %v385 = vunpack.c.l.b16 %v101
    %v386 = vunpack.c.l.b16 %v102
    %v387 = vunpack.c.l.b16 %v103
    %v388 = vunpack.c.l.b16 %v104
    %v389 = vunpack.c.l.b16 %v105
    %v390 = vunpack.c.l.b16 %v106
    %v391 = vunpack.c.l.b16 %v107
    %v392 = vunpack.c.l.b16 %v108
    %v393 = vunpack.c.l.b16 %v109
    %v394 = vunpack.c.l.b16 %v110
    %v395 = vunpack.c.l.b16 %v111
    %v396 = vunpack.c.l.b16 %v112
    %v397 = vunpack.c.l.b16 %v113
    %v398 = vunpack.c.l.b16 %v114
    %v399 = vunpack.c.l.b16 %v115
    %v400 = vunpack.c.l.b16 %v116
    %v401 = vunpack.c.l.b16 %v117
    %v402 = vunpack.c.l.b16 %v118
    %v403 = vunpack.c.l.b16 %v119
    %v404 = vunpack.c.l.b16 %v120
    %v405 = vunpack.c.l.b16 %v121
    %v406 = vunpack.c.l.b16 %v122
    %v407 = vunpack.c.l.b16 %v123
    %v408 = vunpack.c.l.b16 %v124
    %v409 = vunpack.c.l.b16 %v125
    %v410 = vunpack.c.l.b16 %v126
    %v411 = vunpack.c.l.b16 %v127
    %v412 = vunpack.c.l.b16 %v128
    %v413 = vunpack.c.l.b16 %v129
    %v414 = vunpack.c.l.b16 %v130
    %v415 = vunpack.c.l.b16 %v131
    %v416 = vunpack.c.l.b16 %v132
    %v417 = vunpack.c.l.b16 %v133
    %v418 = vunpack.c.l.b16 %v134
    %v419 = vunpack.c.l.b16 %v135
    %v420 = vunpack.c.l.b16 %v136
    %v421 = vunpack.c.l.b16 %v137
    %v422 = vunpack.c.l.b16 %v138
    %v423 = vunpack.c.l.b16 %v139
    %v424 = vunpack.c.l.b16 %v140
    %v425 = vunpack.c.l.b16 %v141
    %v426 = vunpack.c.l.b16 %v142
    %v427 = vunpack.c.l.b16 %v143
    %v428 = vunpack.c.l.b16 %v144
    %v429 = vunpack.c.l.b16 %v145
    %v430 = vunpack.c.l.b16 %v146
    %v431 = vunpack.c.l.b16 %v147
    %v432 = vunpack.c.l.b16 %v148
    %v433 = vunpack.c.l.b16 %v149
    %v434 = vunpack.c.l.b16 %v150
    %v435 = vunpack.c.l.b16 %v151
    %v436 = vunpack.c.l.b16 %v152
    %v437 = vunpack.c.l.b16 %v153
    %v438 = vunpack.c.l.b16 %v154
    %v439 = vunpack.c.l.b16 %v155
    %v440 = vunpack.c.l.b16 %v156
    %v441 = vunpack.c.l.b16 %v157
    %v442 = vunpack.c.l.b16 %v158
    %v443 = vunpack.c.l.b16 %v159
    %v444 = vunpack.c.l.b16 %v160
    %v445 = vunpack.c.l.b16 %v161
    %v446 = vunpack.c.l.b16 %v162
    %v447 = vunpack.c.l.b16 %v163
    %v448 = vunpack.c.l.b16 %v164
    %v449 = vunpack.c.l.b16 %v165
    %v450 = vunpack.c.l.b16 %v166
    %v451 = vunpack.c.l.b16 %v167
    %v452 = vunpack.c.l.b16 %v168
    %v453 = vunpack.c.l.b16 %v169
    %v454 = vunpack.c.l.b16 %v170
    %v455 = vunpack.c.l.b16 %v171
    %v456 = vunpack.c.l.b16 %v172
    %v457 = vunpack.c.l.b16 %v173
    %v458 = vunpack.c.l.b16 %v174
    %v459 = vunpack.c.l.b16 %v175
    %v460 = vunpack.c.l.b16 %v176
    %v461 = vunpack.c.l.b16 %v177
    %v462 = vunpack.c.l.b16 %v178
    %v463 = vunpack.c.l.b16 %v179
    %v464 = vunpack.c.l.b16 %v180
    %v465 = vunpack.c.l.b16 %v181
    %v466 = vunpack.c.l.b16 %v182
    %v467 = vunpack.c.l.b16 %v183
    %v468 = vunpack.c.l.b16 %v184
    %v469 = vunpack.c.l.b16 %v185
    %v470 = vunpack.c.l.b16 %v186
    %v471 = vunpack.c.l.b16 %v187
    %v472 = vunpack.c.l.b16 %v188
    %v473 = vunpack.c.l.b16 %v189
    %v474 = vunpack.c.l.b16 %v190
    %v475 = vunpack.c.l.b16 %v191
    %v476 = vunpack.c.l.b16 %v192
    %v477 = vunpack.c.l.b16 %v193
    %v478 = vunpack.c.l.b16 %v194
    %v479 = vunpack.c.l.b16 %v195
    %v480 = vunpack.c.l.b16 %v196
    %v481 = vunpack.c.l.b16 %v197
    %v482 = vunpack.c.l.b16 %v198
    %v483 = vpack.c.b16 %v356, %v355
    %v484 = vpack.c.b16 %v358, %v357
    %v485 = vpack.c.b16 %v360, %v359
    %v486 = vpack.c.b16 %v362, %v361
    %v487 = vpack.c.b16 %v364, %v363
    %v488 = vpack.c.b16 %v366, %v365
    %v489 = vpack.c.b16 %v368, %v367
    %v490 = vpack.c.b16 %v370, %v369
    %v491 = vpack.c.b16 %v372, %v371
    %v492 = vpack.c.b16 %v374, %v373
    %v493 = vpack.c.b16 %v376, %v375
    %v494 = vpack.c.b16 %v378, %v377
    %v495 = vpack.c.b16 %v380, %v379
    %v496 = vpack.c.b16 %v382, %v381
    %v497 = vpack.c.b16 %v384, %v383
    %v498 = vpack.c.b16 %v386, %v385
    %v499 = vpack.c.b16 %v388, %v387
    %v500 = vpack.c.b16 %v390, %v389
    %v501 = vpack.c.b16 %v392, %v391
    %v502 = vpack.c.b16 %v394, %v393
    %v503 = vpack.c.b16 %v396, %v395
    %v504 = vpack.c.b16 %v398, %v397
    %v505 = vpack.c.b16 %v400, %v399
    %v506 = vpack.c.b16 %v402, %v401
    %v507 = vpack.c.b16 %v404, %v403
    %v508 = vpack.c.b16 %v406, %v405
    %v509 = vpack.c.b16 %v408, %v407
    %v510 = vpack.c.b16 %v410, %v409
    %v511 = vpack.c.b16 %v412, %v411
    %v512 = vpack.c.b16 %v414, %v413
    %v513 = vpack.c.b16 %v416, %v415
    %v514 = vpack.c.b16 %v418, %v417
    %v515 = vpack.c.b16 %v420, %v419
    %v516 = vpack.c.b16 %v422, %v421
    %v517 = vpack.c.b16 %v424, %v423
    %v518 = vpack.c.b16 %v426, %v425
    %v519 = vpack.c.b16 %v428, %v427
    %v520 = vpack.c.b16 %v430, %v429
    %v521 = vpack.c.b16 %v432, %v431
    %v522 = vpack.c.b16 %v434, %v433
    %v523 = vpack.c.b16 %v436, %v435
    %v524 = vpack.c.b16 %v438, %v437
    %v525 = vpack.c.b16 %v440, %v439
    %v526 = vpack.c.b16 %v442, %v441
    %v527 = vpack.c.b16 %v444, %v443
    %v528 = vpack.c.b16 %v446, %v445
    %v529 = vpack.c.b16 %v448, %v447
    %v530 = vpack.c.b16 %v450, %v449
    %v531 = vpack.c.b16 %v452, %v451
    %v532 = vpack.c.b16 %v454, %v453
    %v533 = vpack.c.b16 %v456, %v455
    %v534 = vpack.c.b16 %v458, %v457
    %v535 = vpack.c.b16 %v460, %v459
    %v536 = vpack.c.b16 %v462, %v461
    %v537 = vpack.c.b16 %v464, %v463
    %v538 = vpack.c.b16 %v466, %v465
    %v539 = vpack.c.b16 %v468, %v467
    %v540 = vpack.c.b16 %v470, %v469
    %v541 = vpack.c.b16 %v472, %v471
    %v542 = vpack.c.b16 %v474, %v473
    %v543 = vpack.c.b16 %v476, %v475
    %v544 = vpack.c.b16 %v478, %v477
    %v545 = vpack.c.b16 %v480, %v479
    %v546 = vpack.c.b16 %v482, %v481
    %611 = vmatprep.subr.bf16.mxu0 0
    %612 = vmatpush1.bf16.msra.mxu0 %v483
    %613 = vmatprep.subr.bf16.mxu0 0
    %614 = vmatpush1.bf16.msra.mxu0 %v484
    %615 = vmatprep.subr.bf16.mxu0 0
    %616 = vmatpush1.bf16.msra.mxu0 %v485
    %617 = vmatprep.subr.bf16.mxu0 0
    %618 = vmatpush1.bf16.msra.mxu0 %v486
    %619 = vmatprep.subr.bf16.mxu0 0
    %620 = vmatpush1.bf16.msra.mxu0 %v487
    %621 = vmatprep.subr.bf16.mxu0 0
    %622 = vmatpush1.bf16.msra.mxu0 %v488
    %623 = vmatprep.subr.bf16.mxu0 0
    %624 = vmatpush1.bf16.msra.mxu0 %v489
    %625 = vmatprep.subr.bf16.mxu0 0
    %626 = vmatpush1.bf16.msra.mxu0 %v490
    %627 = vmatprep.subr.bf16.mxu0 0
    %628 = vmatpush1.bf16.msra.mxu0 %v491
    %629 = vmatprep.subr.bf16.mxu0 0
    %630 = vmatpush1.bf16.msra.mxu0 %v492
    %631 = vmatprep.subr.bf16.mxu0 0
    %632 = vmatpush1.bf16.msra.mxu0 %v493
    %633 = vmatprep.subr.bf16.mxu0 0
    %634 = vmatpush1.bf16.msra.mxu0 %v494
    %635 = vmatprep.subr.bf16.mxu0 0
    %636 = vmatpush1.bf16.msra.mxu0 %v495
    %637 = vmatprep.subr.bf16.mxu0 0
    %638 = vmatpush1.bf16.msra.mxu0 %v496
    %639 = vmatprep.subr.bf16.mxu0 0
    %640 = vmatpush1.bf16.msra.mxu0 %v497
    %641 = vmatprep.subr.bf16.mxu0 0
    %642 = vmatpush1.bf16.msra.mxu0 %v498
    %643 = vmatprep.mubr.bf16.mxu0 %v212
    %644 = vmatmul.mubr.bf16.gmra.mrb[0].mxu0 %v211
    %v645 = vpop.f32.mrb[0].mxu0
    %v646 = vadd.f32 0.0, %v645
    %v647 = vpop.f32.mrb[0].mxu0
    %v648 = vpop.f32.mrb[0].mxu0
    %v649 = vpop.f32.mrb[0].mxu0
    %650 = vdwg.mxu0
    %651 = vmatprep.subr.bf16.mxu0 0
    %652 = vmatpush1.bf16.msra.mxu0 %v499
    %653 = vmatprep.subr.bf16.mxu0 0
    %654 = vmatpush1.bf16.msra.mxu0 %v500
    %655 = vmatprep.subr.bf16.mxu0 0
    %656 = vmatpush1.bf16.msra.mxu0 %v501
    %657 = vmatprep.subr.bf16.mxu0 0
    %658 = vmatpush1.bf16.msra.mxu0 %v502
    %659 = vmatprep.subr.bf16.mxu0 0
    %660 = vmatpush1.bf16.msra.mxu0 %v503
    %661 = vmatprep.subr.bf16.mxu0 0
    %662 = vmatpush1.bf16.msra.mxu0 %v504
    %663 = vmatprep.subr.bf16.mxu0 0
    %664 = vmatpush1.bf16.msra.mxu0 %v505
    %665 = vmatprep.subr.bf16.mxu0 0
    %666 = vmatpush1.bf16.msra.mxu0 %v506
    %667 = vmatprep.subr.bf16.mxu0 0
    %668 = vmatpush1.bf16.msra.mxu0 %v507
    %669 = vmatprep.subr.bf16.mxu0 0
    %670 = vmatpush1.bf16.msra.mxu0 %v508
    %671 = vmatprep.subr.bf16.mxu0 0
    %672 = vmatpush1.bf16.msra.mxu0 %v509
    %673 = vmatprep.subr.bf16.mxu0 0
    %674 = vmatpush1.bf16.msra.mxu0 %v510
    %675 = vmatprep.subr.bf16.mxu0 0
    %676 = vmatpush1.bf16.msra.mxu0 %v511
    %677 = vmatprep.subr.bf16.mxu0 0
    %678 = vmatpush1.bf16.msra.mxu0 %v512
    %679 = vmatprep.subr.bf16.mxu0 0
    %680 = vmatpush1.bf16.msra.mxu0 %v513
    %681 = vmatprep.subr.bf16.mxu0 0
    %682 = vmatpush1.bf16.msra.mxu0 %v514
    %683 = vmatprep.mubr.bf16.mxu0 %v214
    %684 = vmatmul.mubr.bf16.gmra.mrb[0].mxu0 %v213
    %v685 = vpop.f32.mrb[0].mxu0
    %v686 = vadd.f32 %v646, %v685
    %v687 = vpop.f32.mrb[0].mxu0
    %v688 = vpop.f32.mrb[0].mxu0
    %v689 = vpop.f32.mrb[0].mxu0
    %690 = vdwg.mxu0
    %691 = vmatprep.subr.bf16.mxu0 0
    %692 = vmatpush1.bf16.msra.mxu0 %v515
    %693 = vmatprep.subr.bf16.mxu0 0
    %694 = vmatpush1.bf16.msra.mxu0 %v516
    %695 = vmatprep.subr.bf16.mxu0 0
    %696 = vmatpush1.bf16.msra.mxu0 %v517
    %697 = vmatprep.subr.bf16.mxu0 0
    %698 = vmatpush1.bf16.msra.mxu0 %v518
    %699 = vmatprep.subr.bf16.mxu0 0
    %700 = vmatpush1.bf16.msra.mxu0 %v519
    %701 = vmatprep.subr.bf16.mxu0 0
    %702 = vmatpush1.bf16.msra.mxu0 %v520
    %703 = vmatprep.subr.bf16.mxu0 0
    %704 = vmatpush1.bf16.msra.mxu0 %v521
    %705 = vmatprep.subr.bf16.mxu0 0
    %706 = vmatpush1.bf16.msra.mxu0 %v522
    %707 = vmatprep.subr.bf16.mxu0 0
    %708 = vmatpush1.bf16.msra.mxu0 %v523
    %709 = vmatprep.subr.bf16.mxu0 0
    %710 = vmatpush1.bf16.msra.mxu0 %v524
    %711 = vmatprep.subr.bf16.mxu0 0
    %712 = vmatpush1.bf16.msra.mxu0 %v525
    %713 = vmatprep.subr.bf16.mxu0 0
    %714 = vmatpush1.bf16.msra.mxu0 %v526
    %715 = vmatprep.subr.bf16.mxu0 0
    %716 = vmatpush1.bf16.msra.mxu0 %v527
    %717 = vmatprep.subr.bf16.mxu0 0
    %718 = vmatpush1.bf16.msra.mxu0 %v528
    %719 = vmatprep.subr.bf16.mxu0 0
    %720 = vmatpush1.bf16.msra.mxu0 %v529
    %721 = vmatprep.subr.bf16.mxu0 0
    %722 = vmatpush1.bf16.msra.mxu0 %v530
    %723 = vmatprep.mubr.bf16.mxu0 %v216
    %724 = vmatmul.mubr.bf16.gmra.mrb[0].mxu0 %v215
    %v725 = vpop.f32.mrb[0].mxu0
    %v726 = vadd.f32 %v686, %v725
    %v727 = vpop.f32.mrb[0].mxu0
    %v728 = vpop.f32.mrb[0].mxu0
    %v729 = vpop.f32.mrb[0].mxu0
    %730 = vdwg.mxu0
    %731 = vmatprep.subr.bf16.mxu0 0
    %732 = vmatpush1.bf16.msra.mxu0 %v531
    %733 = vmatprep.subr.bf16.mxu0 0
    %734 = vmatpush1.bf16.msra.mxu0 %v532
    %735 = vmatprep.subr.bf16.mxu0 0
    %736 = vmatpush1.bf16.msra.mxu0 %v533
    %737 = vmatprep.subr.bf16.mxu0 0
    %738 = vmatpush1.bf16.msra.mxu0 %v534
    %739 = vmatprep.subr.bf16.mxu0 0
    %740 = vmatpush1.bf16.msra.mxu0 %v535
    %741 = vmatprep.subr.bf16.mxu0 0
    %742 = vmatpush1.bf16.msra.mxu0 %v536
    %743 = vmatprep.subr.bf16.mxu0 0
    %744 = vmatpush1.bf16.msra.mxu0 %v537
    %745 = vmatprep.subr.bf16.mxu0 0
    %746 = vmatpush1.bf16.msra.mxu0 %v538
    %747 = vmatprep.subr.bf16.mxu0 0
    %748 = vmatpush1.bf16.msra.mxu0 %v539
    %749 = vmatprep.subr.bf16.mxu0 0
    %750 = vmatpush1.bf16.msra.mxu0 %v540
    %751 = vmatprep.subr.bf16.mxu0 0
    %752 = vmatpush1.bf16.msra.mxu0 %v541
    %753 = vmatprep.subr.bf16.mxu0 0
    %754 = vmatpush1.bf16.msra.mxu0 %v542
    %755 = vmatprep.subr.bf16.mxu0 0
    %756 = vmatpush1.bf16.msra.mxu0 %v543
    %757 = vmatprep.subr.bf16.mxu0 0
    %758 = vmatpush1.bf16.msra.mxu0 %v544
    %759 = vmatprep.subr.bf16.mxu0 0
    %760 = vmatpush1.bf16.msra.mxu0 %v545
    %761 = vmatprep.subr.bf16.mxu0 0
    %762 = vmatpush1.bf16.msra.mxu0 %v546
    %763 = vmatprep.mubr.bf16.mxu0 %v218
    %764 = vmatmul.mubr.bf16.gmra.mrb[0].mxu0 %v217
    %v765 = vpop.f32.mrb[0].mxu0
    %v766 = vadd.f32 %v726, %v765
    %v767 = vpop.f32.mrb[0].mxu0
    %v768 = vpop.f32.mrb[0].mxu0
    %v769 = vpop.f32.mrb[0].mxu0
    %770 = vdwg.mxu0
    %v771 = vadd.f32 %v66, %v766
    %772 = vst [vmem:[#allocation2] sm:$0xff] %v771
    // Predicated region
    $region38: #{tpu_custom_call.1} parent=1 // pred_check
      %p773 = pneg %p61
    $region39: #{tpu_custom_call.1} parent=1 // pred_check_branch
      %775 = sbr.rel (%p773) target = $region41
    $region40: #{tpu_custom_call.1} parent=1 // pred_region
      %v776 = vld [vmem:[#allocation2] sm:$0xff]
      %v777 = vld [vmem:[%s2] sm:$0x1]
      %v779 = vlaneseq
      %v780 = vshrl.u32 %v779, 7
      %v781 = vsub.s32 0, %v780
      %v782 = vrot.slane %v777, %v781
      %v784 = vadd.f32 %v776, %v782
      %v785 = vmax.f32 %v784, 0.0
      %v786 = vld [vmem:[#allocation8] sm:$0xf]
      %v787 = vld [vmem:[#allocation8 + $0x4] sm:$0xf]
      %v788 = vld [vmem:[#allocation8 + $0x8] sm:$0xf]
      %v789 = vld [vmem:[#allocation8 + $0xc] sm:$0xf]
      %v790 = vld [vmem:[#allocation8 + $0x10] sm:$0xf]
      %v791 = vld [vmem:[#allocation8 + $0x14] sm:$0xf]
      %v792 = vld [vmem:[#allocation8 + $0x18] sm:$0xf]
      %v793 = vld [vmem:[#allocation8 + $0x1c] sm:$0xf]
      %v794 = vld [vmem:[#allocation8 + $0x20] sm:$0xf]
      %v795 = vld [vmem:[#allocation8 + $0x24] sm:$0xf]
      %v796 = vld [vmem:[#allocation8 + $0x28] sm:$0xf]
      %v797 = vld [vmem:[#allocation8 + $0x2c] sm:$0xf]
      %v798 = vld [vmem:[#allocation8 + $0x30] sm:$0xf]
      %v799 = vld [vmem:[#allocation8 + $0x34] sm:$0xf]
      %v800 = vld [vmem:[#allocation8 + $0x38] sm:$0xf]
      %v801 = vld [vmem:[#allocation8 + $0x3c] sm:$0xf]
      %v802 = vld [vmem:[%s4] sm:$0x1]
      %v803 = vpack.c.bf16 %v785, %v785
      %v805 = vlaneseq
      %v806 = vshrl.u32 %v805, 7
      %v807 = vsub.s32 0, %v806
      %v808 = vrot.slane %v802, %v807
      %v826 = vunpack.c.l.b16 %v786
      %v827 = vunpack.c.l.b16 %v787
      %v828 = vunpack.c.l.b16 %v788
      %v829 = vunpack.c.l.b16 %v789
      %v830 = vunpack.c.l.b16 %v790
      %v831 = vunpack.c.l.b16 %v791
      %v832 = vunpack.c.l.b16 %v792
      %v833 = vunpack.c.l.b16 %v793
      %v834 = vunpack.c.l.b16 %v794
      %v835 = vunpack.c.l.b16 %v795
      %v836 = vunpack.c.l.b16 %v796
      %v837 = vunpack.c.l.b16 %v797
      %v838 = vunpack.c.l.b16 %v798
      %v839 = vunpack.c.l.b16 %v799
      %v840 = vunpack.c.l.b16 %v800
      %v841 = vunpack.c.l.b16 %v801
      %v842 = vpack.c.b16 %v827, %v826
      %v843 = vpack.c.b16 %v829, %v828
      %v844 = vpack.c.b16 %v831, %v830
      %v845 = vpack.c.b16 %v833, %v832
      %v846 = vpack.c.b16 %v835, %v834
      %v847 = vpack.c.b16 %v837, %v836
      %v848 = vpack.c.b16 %v839, %v838
      %v849 = vpack.c.b16 %v841, %v840
      %858 = vmatprep.subr.bf16.mxu0 0
      %859 = vmatpush1.bf16.msra.mxu0 %v842
      %860 = vmatprep.subr.bf16.mxu0 0
      %861 = vmatpush1.bf16.msra.mxu0 %v843
      %862 = vmatprep.subr.bf16.mxu0 0
      %863 = vmatpush1.bf16.msra.mxu0 %v844
      %864 = vmatprep.subr.bf16.mxu0 0
      %865 = vmatpush1.bf16.msra.mxu0 %v845
      %866 = vmatprep.subr.bf16.mxu0 0
      %867 = vmatpush1.bf16.msra.mxu0 %v846
      %868 = vmatprep.subr.bf16.mxu0 0
      %869 = vmatpush1.bf16.msra.mxu0 %v847
      %870 = vmatprep.subr.bf16.mxu0 0
      %871 = vmatpush1.bf16.msra.mxu0 %v848
      %872 = vmatprep.subr.bf16.mxu0 0
      %873 = vmatpush1.bf16.msra.mxu0 %v849
      %874 = vmatprep.subr.bf16.mxu0 0
      %875 = vmatpush1.bf16.msra.mxu0 0
      %876 = vmatprep.subr.bf16.mxu0 0
      %877 = vmatpush1.bf16.msra.mxu0 0
      %878 = vmatprep.subr.bf16.mxu0 0
      %879 = vmatpush1.bf16.msra.mxu0 0
      %880 = vmatprep.subr.bf16.mxu0 0
      %881 = vmatpush1.bf16.msra.mxu0 0
      %882 = vmatprep.subr.bf16.mxu0 0
      %883 = vmatpush1.bf16.msra.mxu0 0
      %884 = vmatprep.subr.bf16.mxu0 0
      %885 = vmatpush1.bf16.msra.mxu0 0
      %886 = vmatprep.subr.bf16.mxu0 0
      %887 = vmatpush1.bf16.msra.mxu0 0
      %888 = vmatprep.subr.bf16.mxu0 0
      %889 = vmatpush1.bf16.msra.mxu0 0
      %890 = vmatprep.mubr.bf16.mxu0 0
      %891 = vmatmul.mubr.bf16.gmra.mrb[0].mxu0 %v803
      %v892 = vpop.f32.mrb[0].mxu0
      %v893 = vadd.f32 %v808, %v892
      %v894 = vpop.f32.mrb[0].mxu0
      %v895 = vpop.f32.mrb[0].mxu0
      %v896 = vpop.f32.mrb[0].mxu0
      %897 = vdwg.mxu0
      %898 = vst [vmem:[#allocation9] sm:$0xff] %v893
    $region41: #{tpu_custom_call.1} parent=1 // pred_fallthru
      _
    // Predicated region
    $region42: #{tpu_custom_call.1} parent=1 // pred_check
      _
    $region43: #{tpu_custom_call.1} parent=1 // pred_check_branch
      %900 = sbr.rel (0) target = $region45
    $region44: #{tpu_custom_call.1} parent=1 // pred_region
      %s902 = ssub.s32 128, 128
      %903 = vsyncadd [#allocation5], %s902
      %s905 = sshll.u32 [#allocation9], 4
      %s906 = int_to_ptr.vmem [resolvable:$true] %s905
      %908 = dma.vmem_to_hbm [thread:$0]  %s906, 128, %s5, [#allocation5]
    $region45: #{tpu_custom_call.1} parent=1 // pred_fallthru
      _
    // Predicated region
    $region46: #{tpu_custom_call.1} parent=1 // pred_check
      _
    $region47: #{tpu_custom_call.1} parent=1 // pred_check_branch
      %910 = sbr.rel (0) target = $region49
    $region48: #{tpu_custom_call.1} parent=1 // pred_region
      %911 = dma.done [#allocation5], 128
    $region49: #{tpu_custom_call.1} parent=1 // pred_fallthru
      _
    %912 = vsyncpa [#allocation4], 1
    %913 = vsyncpa [#allocation7], 1
    %914 = vsyncpa [#allocation5], 1

</llo_original>
